<compile_context>
chip_gen: v5e
topology: v5e:2x2
jax: 0.10.0
libtpu: 0.0.40
codegen_flags: <defaults>
</compile_context>

<pallas_src>
import functools

import jax
import jax.numpy as jnp
from jax.experimental import pallas as pl
from jax.experimental.pallas import tpu as pltpu

LANE = 128


# ----------------------------------------------------------------------------
# Kernels
# ----------------------------------------------------------------------------
def _transform_kernel(x_ref, w_ref, b_ref, root_ref, msgs_ref, *, fout):
    """One wide matmul producing the root term and all per-relation messages.

    x_ref:    (TM, Fin)                f32
    w_ref:    (Fin, (R+1)*Fp)          f32   = [W_root | W_r0 | W_r1 | ...]
    b_ref:    (1, Fp)                  f32
    root_ref: (TM, Fp)                 f32   = x @ W_root + b
    msgs_ref: (TM, R*Fp)               bf16  = x @ [W_r0 | W_r1 | ...]
    """
    h = jnp.dot(x_ref[...], w_ref[...], preferred_element_type=jnp.float32)
    root_ref[...] = h[:, :fout] + b_ref[...]
    msgs_ref[...] = h[:, fout:].astype(msgs_ref.dtype)


def _agg_kernel(a_ref, root_ref, msgs_ref, o_ref, *, apply_relu):
    """Mean-aggregation over relations, accumulating into the resident output.

    Grid: (row_tiles [parallel], relations [arbitrary/reduction]).
    a_ref:    (TM, N)   bf16  row-normalized adjacency of relation r
    root_ref: (TM, Fp)  f32   x @ W_root + b  (row tile)
    msgs_ref: (N, Fp)   bf16  x @ W_r         (all nodes, relation r)
    o_ref:    (TM, Fp)  f32   accumulator / output (resident across r)
    """
    r = pl.program_id(1)

    @pl.when(r == 0)
    def _():
        o_ref[...] = root_ref[...]

    o_ref[...] += jnp.dot(a_ref[...], msgs_ref[...],
                          preferred_element_type=jnp.float32)

    if apply_relu:
        @pl.when(r == pl.num_programs(1) - 1)
        def _():
            o_ref[...] = jnp.maximum(o_ref[...], 0.0)


def _agg_cls_kernel(a_ref, root_ref, msgs_ref, wc_ref, bc_ref, o_ref, lg_ref):
    """Conv2 aggregation with the Linear classifier fused into the epilogue."""
    r = pl.program_id(1)

    @pl.when(r == 0)
    def _():
        o_ref[...] = root_ref[...]

    o_ref[...] += jnp.dot(a_ref[...], msgs_ref[...],
                          preferred_element_type=jnp.float32)

    @pl.when(r == pl.num_programs(1) - 1)
    def _():
        lg_ref[...] = (
            jnp.dot(o_ref[...], wc_ref[...], preferred_element_type=jnp.float32)
            + bc_ref[...])


# ----------------------------------------------------------------------------
# Wrappers
# ----------------------------------------------------------------------------
def _round_up(x, m):
    return ((x + m - 1) // m) * m


def _pad_last(a, target):
    pad = target - a.shape[-1]
    if pad == 0:
        return a
    widths = [(0, 0)] * (a.ndim - 1) + [(0, pad)]
    return jnp.pad(a, widths)


def _choose_row_tile(n, max_tile=256):
    """Largest row tile <= max_tile that divides N (multiple of 8), else full N."""
    if n <= max_tile:
        return n
    for t in (256, 128, 64, 32, 16, 8):
        if n % t == 0:
            return t
    return n


def rgcn_transform(x, w_all, bias, num_relations, tm):
    """x: (N, Fin), w_all: (Fin, (R+1)*Fp), bias: (1, Fp).

    Returns root (N, Fp) f32 and msgs (N, R*Fp) bf16."""
    N, fin = x.shape
    total = w_all.shape[1]
    fp = total // (num_relations + 1)
    kernel = functools.partial(_transform_kernel, fout=fp)
    return pl.pallas_call(
        kernel,
        out_shape=(
            jax.ShapeDtypeStruct((N, fp), jnp.float32),
            jax.ShapeDtypeStruct((N, num_relations * fp), jnp.bfloat16),
        ),
        grid=(N // tm,),
        in_specs=[
            pl.BlockSpec((tm, fin), lambda i: (i, 0)),
            pl.BlockSpec((fin, total), lambda i: (0, 0)),
            pl.BlockSpec((1, fp), lambda i: (0, 0)),
        ],
        out_specs=(
            pl.BlockSpec((tm, fp), lambda i: (i, 0)),
            pl.BlockSpec((tm, num_relations * fp), lambda i: (i, 0)),
        ),
        compiler_params=pltpu.CompilerParams(
            dimension_semantics=("parallel",)),
    )(x, w_all, bias)


def rgcn_aggregate(adj, root, msgs, *, apply_relu, tm):
    """adj: (R, N, N) bf16, root: (N, Fp) f32, msgs: (N, R*Fp) bf16."""
    R, N, _ = adj.shape
    fp = root.shape[1]
    kernel = functools.partial(_agg_kernel, apply_relu=apply_relu)
    return pl.pallas_call(
        kernel,
        out_shape=jax.ShapeDtypeStruct((N, fp), jnp.float32),
        grid=(N // tm, R),
        in_specs=[
            pl.BlockSpec((pl.Squeezed(), tm, N), lambda i, r: (r, i, 0)),
            pl.BlockSpec((tm, fp), lambda i, r: (i, 0)),
            pl.BlockSpec((N, fp), lambda i, r: (0, r)),
        ],
        out_specs=pl.BlockSpec((tm, fp), lambda i, r: (i, 0)),
        compiler_params=pltpu.CompilerParams(
            dimension_semantics=("parallel", "arbitrary")),
    )(adj, root, msgs)


def rgcn_aggregate_with_classifier(adj, root, msgs, w_cls_t, b_cls, *, tm):
    """Conv2 aggregation + fused classifier.  Returns (x2_p, logits_p)."""
    R, N, _ = adj.shape
    fp = root.shape[1]
    cp = w_cls_t.shape[1]
    return pl.pallas_call(
        _agg_cls_kernel,
        out_shape=(
            jax.ShapeDtypeStruct((N, fp), jnp.float32),
            jax.ShapeDtypeStruct((N, cp), jnp.float32),
        ),
        grid=(N // tm, R),
        in_specs=[
            pl.BlockSpec((pl.Squeezed(), tm, N), lambda i, r: (r, i, 0)),
            pl.BlockSpec((tm, fp), lambda i, r: (i, 0)),
            pl.BlockSpec((N, fp), lambda i, r: (0, r)),
            pl.BlockSpec((fp, cp), lambda i, r: (0, 0)),
            pl.BlockSpec((1, cp), lambda i, r: (0, 0)),
        ],
        out_specs=(
            pl.BlockSpec((tm, fp), lambda i, r: (i, 0)),
            pl.BlockSpec((tm, cp), lambda i, r: (i, 0)),
        ),
        compiler_params=pltpu.CompilerParams(
            dimension_semantics=("parallel", "arbitrary")),
    )(adj, root, msgs, w_cls_t, b_cls)


def build_dense_adjacency(edge_index, edge_type, num_nodes, num_relations):
    """Glue: dense per-relation adjacency with mean normalization (aggr='mean').

    Cast to bf16: values are 1/deg, so error is bounded; halves HBM traffic on
    the dominant stream and enables bf16 MXU throughput."""
    src = edge_index[0]
    dst = edge_index[1]
    adj = jnp.zeros((num_relations, num_nodes, num_nodes), dtype=jnp.float32)
    adj = adj.at[edge_type, dst, src].add(1.0)
    deg = adj.sum(axis=2, keepdims=True)
    adj = adj / jnp.maximum(deg, 1.0)
    return adj.astype(jnp.bfloat16)


def prepare_params(p, num_relations):
    """Pad channel dims to multiples of 128 (lane-dense) and concatenate the
    per-relation weights into one wide matrix per layer. Run outside jit."""
    R = num_relations
    fin, hid = p["w_root1"].shape
    hid2, out = p["w_root2"].shape
    ncls = p["b_cls"].shape[0]
    hp = _round_up(hid, LANE)
    op = _round_up(out, LANE)
    cp = _round_up(ncls, LANE)

    # conv1: [W_root | W_r0 | ...]  (Fin, (R+1)*Hp)
    w_root1 = _pad_last(p["w_root1"], hp)
    w_rel1 = _pad_last(p["w_rel1"], hp)
    w_all1 = jnp.concatenate(
        [w_root1, jnp.transpose(w_rel1, (1, 0, 2)).reshape(fin, R * hp)], axis=1)
    b1 = _pad_last(p["b1"], hp).reshape(1, hp)

    # conv2: input dim padded to Hp (extra rows hit zero-padded h columns)
    w_root2 = jnp.pad(_pad_last(p["w_root2"], op), ((0, hp - hid2), (0, 0)))
    w_rel2 = jnp.pad(_pad_last(p["w_rel2"], op), ((0, 0), (0, hp - hid2), (0, 0)))
    w_all2 = jnp.concatenate(
        [w_root2, jnp.transpose(w_rel2, (1, 0, 2)).reshape(hp, R * op)], axis=1)
    b2 = _pad_last(p["b2"], op).reshape(1, op)

    # classifier (already stored transposed: (out, C)) -> (Op, Cp)
    w_cls_t = jnp.pad(_pad_last(p["w_cls_t"], cp), ((0, op - out), (0, 0)))
    b_cls = _pad_last(p["b_cls"], cp).reshape(1, cp)

    return {"w_all1": w_all1, "b1": b1,
            "w_all2": w_all2, "b2": b2,
            "w_cls_t": w_cls_t, "b_cls": b_cls}


def rgcn_forward(pp, x, edge_index, edge_type, *,
                 num_relations, out_channels, num_classes):
    N = x.shape[0]
    adj = build_dense_adjacency(edge_index, edge_type, N, num_relations)
    tm = _choose_row_tile(N)

    # conv1 + ReLU
    root1, msgs1 = rgcn_transform(x, pp["w_all1"], pp["b1"], num_relations, tm)
    h = rgcn_aggregate(adj, root1, msgs1, apply_relu=True, tm=tm)

    # conv2 with fused classifier epilogue
    root2, msgs2 = rgcn_transform(h, pp["w_all2"], pp["b2"], num_relations, tm)
    x2_p, logits_p = rgcn_aggregate_with_classifier(
        adj, root2, msgs2, pp["w_cls_t"], pp["b_cls"], tm=tm)

    # slice off channel padding in glue
    return x2_p[:, :out_channels], logits_p[:, :num_classes]


# ----------------------------------------------------------------------------
# Main
# ----------------------------------------------------------------------------
if __name__ == "__main__":
    # Small synthetic problem consistent with RGCN(in, hidden, out, R, classes)
    num_nodes = 16
    in_channels = 8
    hidden_channels = 16
    out_channels = 16
    num_relations = 3
    num_classes = 4
    num_edges = 48

    key = jax.random.PRNGKey(0)
    keys = jax.random.split(key, 12)

    # Deterministic parameter init (synthetic — no checkpoint load).
    def init(k, shape, fan_in):
        bound = 1.0 / jnp.sqrt(jnp.float32(fan_in))
        return jax.random.uniform(k, shape, jnp.float32, -bound, bound)

    raw_params = {
        "w_rel1": init(keys[0], (num_relations, in_channels, hidden_channels), in_channels),
        "w_root1": init(keys[1], (in_channels, hidden_channels), in_channels),
        "b1": init(keys[2], (hidden_channels,), in_channels),
        "w_rel2": init(keys[3], (num_relations, hidden_channels, out_channels), hidden_channels),
        "w_root2": init(keys[4], (hidden_channels, out_channels), hidden_channels),
        "b2": init(keys[5], (out_channels,), hidden_channels),
        # nn.Linear weight is (num_classes, out_channels); store transposed.
        "w_cls_t": init(keys[6], (out_channels, num_classes), out_channels),
        "b_cls": init(keys[7], (num_classes,), out_channels),
    }

    # Inputs: node features, edge_index (2, E), edge_type (E,)
    x = jax.random.normal(keys[8], (num_nodes, in_channels), jnp.float32)
    edge_index = jax.random.randint(keys[9], (2, num_edges), 0, num_nodes, jnp.int32)
    edge_type = jax.random.randint(keys[10], (num_edges,), 0, num_relations, jnp.int32)

    padded_params = prepare_params(raw_params, num_relations)

    fwd = jax.jit(functools.partial(
        rgcn_forward, num_relations=num_relations,
        out_channels=out_channels, num_classes=num_classes))
    x_out, logits = fwd(padded_params, x, edge_index, edge_type)
    jax.block_until_ready((x_out, logits))

    assert x_out.shape == (num_nodes, out_channels)
    assert logits.shape == (num_nodes, num_classes)
    assert bool(jnp.all(jnp.isfinite(x_out))) and bool(jnp.all(jnp.isfinite(logits)))
    print("KERNEL_OK")
</pallas_src>

<mosaic_0001>
module attributes {stable_mosaic.version = 11 : i64} {
  func.func @_transform_kernel(%arg0: i32, %arg1: memref<16x8xf32, #tpu.memory_space<vmem>>, %arg2: memref<8x512xf32, #tpu.memory_space<vmem>>, %arg3: memref<1x128xf32, #tpu.memory_space<vmem>>, %arg4: memref<16x128xf32, #tpu.memory_space<vmem>>, %arg5: memref<16x384xbf16, #tpu.memory_space<vmem>>) attributes {dimension_semantics = [#tpu.dimension_semantics<parallel>], iteration_bounds = array<i64: 1>, scalar_prefetch = 0 : i64, scratch_operands = 0 : i64, tpu.core_type = #tpu.core_type<tc>, window_params = [{transform_indices = @transform_0, window_bounds = array<i64: 16, 8>}, {pipeline_mode = #tpu.pipeline_mode<synchronous>, transform_indices = @transform_1, window_bounds = array<i64: 8, 512>}, {pipeline_mode = #tpu.pipeline_mode<synchronous>, transform_indices = @transform_2, window_bounds = array<i64: 1, 128>}, {transform_indices = @transform_3, window_bounds = array<i64: 16, 128>}, {transform_indices = @transform_4, window_bounds = array<i64: 16, 384>}]} {
    %c0 = arith.constant 0 : index
    %c0_0 = arith.constant 0 : index
    %0 = vector.load %arg1[%c0, %c0_0] : memref<16x8xf32, #tpu.memory_space<vmem>>, vector<16x8xf32>
    %c0_1 = arith.constant 0 : index
    %c0_2 = arith.constant 0 : index
    %1 = vector.load %arg2[%c0_1, %c0_2] : memref<8x512xf32, #tpu.memory_space<vmem>>, vector<8x512xf32>
    %cst = arith.constant dense<0.000000e+00> : vector<16x512xf32>
    %2 = tpu.matmul %0, %1, %cst {dimension_numbers = #tpu.dot_dimension_numbers<[1], [0], [0], [1], [0, 0, 1, 1], [], []>} : vector<16x8xf32>, vector<8x512xf32>, vector<16x512xf32> -> vector<16x512xf32>
    %3 = vector.extract_strided_slice %2 {offsets = [0, 0], sizes = [16, 128], strides = [1, 1]} : vector<16x512xf32> to vector<16x128xf32>
    %c0_3 = arith.constant 0 : index
    %c0_4 = arith.constant 0 : index
    %4 = vector.load %arg3[%c0_3, %c0_4] : memref<1x128xf32, #tpu.memory_space<vmem>>, vector<1x128xf32>
    %5 = vector.broadcast %4 : vector<1x128xf32> to vector<16x128xf32>
    %6 = arith.addf %3, %5 : vector<16x128xf32>
    %c0_5 = arith.constant 0 : index
    %c0_6 = arith.constant 0 : index
    %7 = vector.load %arg4[%c0_5, %c0_6] : memref<16x128xf32, #tpu.memory_space<vmem>>, vector<16x128xf32>
    tpu.vector_store %arg4[%c0_5, %c0_6], %6 {strides = array<i32>} : memref<16x128xf32, #tpu.memory_space<vmem>>, vector<16x128xf32>,
    %8 = vector.extract_strided_slice %2 {offsets = [0, 128], sizes = [16, 384], strides = [1, 1]} : vector<16x512xf32> to vector<16x384xf32>
    %9 = arith.truncf %8 : vector<16x384xf32> to vector<16x384xbf16>
    %c0_7 = arith.constant 0 : index
    %c0_8 = arith.constant 0 : index
    %10 = vector.load %arg5[%c0_7, %c0_8] : memref<16x384xbf16, #tpu.memory_space<vmem>>, vector<16x384xbf16>
    tpu.vector_store %arg5[%c0_7, %c0_8], %9 {strides = array<i32>} : memref<16x384xbf16, #tpu.memory_space<vmem>>, vector<16x384xbf16>,
    return
  }
  func.func @transform_0(%arg0: i32) -> (i32, i32) {
    %c0_i32 = arith.constant 0 : i32
    %c0_i32_0 = arith.constant 0 : i32
    return %arg0, %c0_i32 : i32, i32
  }
  func.func @transform_1(%arg0: i32) -> (i32, i32) {
    %c0_i32 = arith.constant 0 : i32
    %c0_i32_0 = arith.constant 0 : i32
    %c0_i32_1 = arith.constant 0 : i32
    return %c0_i32, %c0_i32_0 : i32, i32
  }
  func.func @transform_2(%arg0: i32) -> (i32, i32) {
    %c0_i32 = arith.constant 0 : i32
    %c0_i32_0 = arith.constant 0 : i32
    %c0_i32_1 = arith.constant 0 : i32
    return %c0_i32, %c0_i32_0 : i32, i32
  }
  func.func @transform_3(%arg0: i32) -> (i32, i32) {
    %c0_i32 = arith.constant 0 : i32
    %c0_i32_0 = arith.constant 0 : i32
    return %arg0, %c0_i32 : i32, i32
  }
  func.func @transform_4(%arg0: i32) -> (i32, i32) {
    %c0_i32 = arith.constant 0 : i32
    %c0_i32_0 = arith.constant 0 : i32
    return %arg0, %c0_i32 : i32, i32
  }
}

module attributes {stable_mosaic.version = 11 : i64} {
  func.func @_agg_kernel(%arg0: i32, %arg1: i32, %arg2: memref<1x16x16xbf16, #tpu.memory_space<vmem>>, %arg3: memref<16x128xf32, #tpu.memory_space<vmem>>, %arg4: memref<16x128xbf16, #tpu.memory_space<vmem>>, %arg5: memref<16x128xf32, #tpu.memory_space<vmem>>) attributes {dimension_semantics = [#tpu.dimension_semantics<parallel>, #tpu.dimension_semantics<arbitrary>], iteration_bounds = array<i64: 1, 3>, scalar_prefetch = 0 : i64, scratch_operands = 0 : i64, tpu.core_type = #tpu.core_type<tc>, window_params = [{transform_indices = @transform_0, window_bounds = array<i64: 1, 16, 16>}, {transform_indices = @transform_1, window_bounds = array<i64: 16, 128>}, {transform_indices = @transform_2, window_bounds = array<i64: 16, 128>}, {transform_indices = @transform_3, window_bounds = array<i64: 16, 128>}]} {
    %c0_i32 = arith.constant 0 : i32
    %0 = arith.cmpi eq, %arg1, %c0_i32 : i32
    %1 = arith.extui %0 : i1 to i32
    %c0_i32_0 = arith.constant 0 : i32
    %2 = arith.cmpi ne, %1, %c0_i32_0 : i32
    scf.if %2 {
      %c0_10 = arith.constant 0 : index
      %c0_11 = arith.constant 0 : index
      %13 = vector.load %arg3[%c0_10, %c0_11] : memref<16x128xf32, #tpu.memory_space<vmem>>, vector<16x128xf32>
      %c0_12 = arith.constant 0 : index
      %c0_13 = arith.constant 0 : index
      %14 = vector.load %arg5[%c0_12, %c0_13] : memref<16x128xf32, #tpu.memory_space<vmem>>, vector<16x128xf32>
      tpu.vector_store %arg5[%c0_12, %c0_13], %13 {strides = array<i32>} : memref<16x128xf32, #tpu.memory_space<vmem>>, vector<16x128xf32>,
    } else {
    }
    %c0 = arith.constant 0 : index
    %c0_1 = arith.constant 0 : index
    %3 = vector.load %arg5[%c0, %c0_1] : memref<16x128xf32, #tpu.memory_space<vmem>>, vector<16x128xf32>
    %c0_2 = arith.constant 0 : index
    %c0_3 = arith.constant 0 : index
    %c0_4 = arith.constant 0 : index
    %4 = vector.load %arg2[%c0_2, %c0_3, %c0_4] : memref<1x16x16xbf16, #tpu.memory_space<vmem>>, vector<1x16x16xbf16>
    %5 = vector.shape_cast %4 : vector<1x16x16xbf16> to vector<16x16xbf16>
    %c0_5 = arith.constant 0 : index
    %c0_6 = arith.constant 0 : index
    %6 = vector.load %arg4[%c0_5, %c0_6] : memref<16x128xbf16, #tpu.memory_space<vmem>>, vector<16x128xbf16>
    %cst = arith.constant dense<0.000000e+00> : vector<16x128xf32>
    %7 = tpu.matmul %5, %6, %cst {dimension_numbers = #tpu.dot_dimension_numbers<[1], [0], [0], [1], [0, 0, 1, 1], [], []>} : vector<16x16xbf16>, vector<16x128xbf16>, vector<16x128xf32> -> vector<16x128xf32>
    %8 = arith.addf %3, %7 : vector<16x128xf32>
    %c0_7 = arith.constant 0 : index
    %c0_8 = arith.constant 0 : index
    %9 = vector.load %arg5[%c0_7, %c0_8] : memref<16x128xf32, #tpu.memory_space<vmem>>, vector<16x128xf32>
    tpu.vector_store %arg5[%c0_7, %c0_8], %8 {strides = array<i32>} : memref<16x128xf32, #tpu.memory_space<vmem>>, vector<16x128xf32>,
    %c2_i32 = arith.constant 2 : i32
    %10 = arith.cmpi eq, %arg1, %c2_i32 : i32
    %11 = arith.extui %10 : i1 to i32
    %c0_i32_9 = arith.constant 0 : i32
    %12 = arith.cmpi ne, %11, %c0_i32_9 : i32
    scf.if %12 {
      %c0_10 = arith.constant 0 : index
      %c0_11 = arith.constant 0 : index
      %13 = vector.load %arg5[%c0_10, %c0_11] : memref<16x128xf32, #tpu.memory_space<vmem>>, vector<16x128xf32>
      %cst_12 = arith.constant 0.000000e+00 : f32
      %14 = vector.broadcast %cst_12 : f32 to vector<16x128xf32>
      %15 = arith.maximumf %13, %14 : vector<16x128xf32>
      %c0_13 = arith.constant 0 : index
      %c0_14 = arith.constant 0 : index
      %16 = vector.load %arg5[%c0_13, %c0_14] : memref<16x128xf32, #tpu.memory_space<vmem>>, vector<16x128xf32>
      tpu.vector_store %arg5[%c0_13, %c0_14], %15 {strides = array<i32>} : memref<16x128xf32, #tpu.memory_space<vmem>>, vector<16x128xf32>,
    } else {
    }
    return
  }
  func.func @transform_0(%arg0: i32, %arg1: i32) -> (i32, i32, i32) {
    %c0_i32 = arith.constant 0 : i32
    %c0_i32_0 = arith.constant 0 : i32
    return %arg1, %arg0, %c0_i32 : i32, i32, i32
  }
  func.func @transform_1(%arg0: i32, %arg1: i32) -> (i32, i32) {
    %c0_i32 = arith.constant 0 : i32
    %c0_i32_0 = arith.constant 0 : i32
    return %arg0, %c0_i32 : i32, i32
  }
  func.func @transform_2(%arg0: i32, %arg1: i32) -> (i32, i32) {
    %c0_i32 = arith.constant 0 : i32
    %c0_i32_0 = arith.constant 0 : i32
    return %c0_i32, %arg1 : i32, i32
  }
  func.func @transform_3(%arg0: i32, %arg1: i32) -> (i32, i32) {
    %c0_i32 = arith.constant 0 : i32
    %c0_i32_0 = arith.constant 0 : i32
    return %arg0, %c0_i32 : i32, i32
  }
}

module attributes {stable_mosaic.version = 11 : i64} {
  func.func @_transform_kernel(%arg0: i32, %arg1: memref<16x128xf32, #tpu.memory_space<vmem>>, %arg2: memref<128x512xf32, #tpu.memory_space<vmem>>, %arg3: memref<1x128xf32, #tpu.memory_space<vmem>>, %arg4: memref<16x128xf32, #tpu.memory_space<vmem>>, %arg5: memref<16x384xbf16, #tpu.memory_space<vmem>>) attributes {dimension_semantics = [#tpu.dimension_semantics<parallel>], iteration_bounds = array<i64: 1>, scalar_prefetch = 0 : i64, scratch_operands = 0 : i64, tpu.core_type = #tpu.core_type<tc>, window_params = [{transform_indices = @transform_0, window_bounds = array<i64: 16, 128>}, {pipeline_mode = #tpu.pipeline_mode<synchronous>, transform_indices = @transform_1, window_bounds = array<i64: 128, 512>}, {pipeline_mode = #tpu.pipeline_mode<synchronous>, transform_indices = @transform_2, window_bounds = array<i64: 1, 128>}, {transform_indices = @transform_3, window_bounds = array<i64: 16, 128>}, {transform_indices = @transform_4, window_bounds = array<i64: 16, 384>}]} {
    %c0 = arith.constant 0 : index
    %c0_0 = arith.constant 0 : index
    %0 = vector.load %arg1[%c0, %c0_0] : memref<16x128xf32, #tpu.memory_space<vmem>>, vector<16x128xf32>
    %c0_1 = arith.constant 0 : index
    %c0_2 = arith.constant 0 : index
    %1 = vector.load %arg2[%c0_1, %c0_2] : memref<128x512xf32, #tpu.memory_space<vmem>>, vector<128x512xf32>
    %cst = arith.constant dense<0.000000e+00> : vector<16x512xf32>
    %2 = tpu.matmul %0, %1, %cst {dimension_numbers = #tpu.dot_dimension_numbers<[1], [0], [0], [1], [0, 0, 1, 1], [], []>} : vector<16x128xf32>, vector<128x512xf32>, vector<16x512xf32> -> vector<16x512xf32>
    %3 = vector.extract_strided_slice %2 {offsets = [0, 0], sizes = [16, 128], strides = [1, 1]} : vector<16x512xf32> to vector<16x128xf32>
    %c0_3 = arith.constant 0 : index
    %c0_4 = arith.constant 0 : index
    %4 = vector.load %arg3[%c0_3, %c0_4] : memref<1x128xf32, #tpu.memory_space<vmem>>, vector<1x128xf32>
    %5 = vector.broadcast %4 : vector<1x128xf32> to vector<16x128xf32>
    %6 = arith.addf %3, %5 : vector<16x128xf32>
    %c0_5 = arith.constant 0 : index
    %c0_6 = arith.constant 0 : index
    %7 = vector.load %arg4[%c0_5, %c0_6] : memref<16x128xf32, #tpu.memory_space<vmem>>, vector<16x128xf32>
    tpu.vector_store %arg4[%c0_5, %c0_6], %6 {strides = array<i32>} : memref<16x128xf32, #tpu.memory_space<vmem>>, vector<16x128xf32>,
    %8 = vector.extract_strided_slice %2 {offsets = [0, 128], sizes = [16, 384], strides = [1, 1]} : vector<16x512xf32> to vector<16x384xf32>
    %9 = arith.truncf %8 : vector<16x384xf32> to vector<16x384xbf16>
    %c0_7 = arith.constant 0 : index
    %c0_8 = arith.constant 0 : index
    %10 = vector.load %arg5[%c0_7, %c0_8] : memref<16x384xbf16, #tpu.memory_space<vmem>>, vector<16x384xbf16>
    tpu.vector_store %arg5[%c0_7, %c0_8], %9 {strides = array<i32>} : memref<16x384xbf16, #tpu.memory_space<vmem>>, vector<16x384xbf16>,
    return
  }
  func.func @transform_0(%arg0: i32) -> (i32, i32) {
    %c0_i32 = arith.constant 0 : i32
    %c0_i32_0 = arith.constant 0 : i32
    return %arg0, %c0_i32 : i32, i32
  }
  func.func @transform_1(%arg0: i32) -> (i32, i32) {
    %c0_i32 = arith.constant 0 : i32
    %c0_i32_0 = arith.constant 0 : i32
    %c0_i32_1 = arith.constant 0 : i32
    return %c0_i32, %c0_i32_0 : i32, i32
  }
  func.func @transform_2(%arg0: i32) -> (i32, i32) {
    %c0_i32 = arith.constant 0 : i32
    %c0_i32_0 = arith.constant 0 : i32
    %c0_i32_1 = arith.constant 0 : i32
    return %c0_i32, %c0_i32_0 : i32, i32
  }
  func.func @transform_3(%arg0: i32) -> (i32, i32) {
    %c0_i32 = arith.constant 0 : i32
    %c0_i32_0 = arith.constant 0 : i32
    return %arg0, %c0_i32 : i32, i32
  }
  func.func @transform_4(%arg0: i32) -> (i32, i32) {
    %c0_i32 = arith.constant 0 : i32
    %c0_i32_0 = arith.constant 0 : i32
    return %arg0, %c0_i32 : i32, i32
  }
}

module attributes {stable_mosaic.version = 11 : i64} {
  func.func @_agg_cls_kernel(%arg0: i32, %arg1: i32, %arg2: memref<1x16x16xbf16, #tpu.memory_space<vmem>>, %arg3: memref<16x128xf32, #tpu.memory_space<vmem>>, %arg4: memref<16x128xbf16, #tpu.memory_space<vmem>>, %arg5: memref<128x128xf32, #tpu.memory_space<vmem>>, %arg6: memref<1x128xf32, #tpu.memory_space<vmem>>, %arg7: memref<16x128xf32, #tpu.memory_space<vmem>>, %arg8: memref<16x128xf32, #tpu.memory_space<vmem>>) attributes {dimension_semantics = [#tpu.dimension_semantics<parallel>, #tpu.dimension_semantics<arbitrary>], iteration_bounds = array<i64: 1, 3>, scalar_prefetch = 0 : i64, scratch_operands = 0 : i64, tpu.core_type = #tpu.core_type<tc>, window_params = [{transform_indices = @transform_0, window_bounds = array<i64: 1, 16, 16>}, {transform_indices = @transform_1, window_bounds = array<i64: 16, 128>}, {transform_indices = @transform_2, window_bounds = array<i64: 16, 128>}, {pipeline_mode = #tpu.pipeline_mode<synchronous>, transform_indices = @transform_3, window_bounds = array<i64: 128, 128>}, {pipeline_mode = #tpu.pipeline_mode<synchronous>, transform_indices = @transform_4, window_bounds = array<i64: 1, 128>}, {transform_indices = @transform_5, window_bounds = array<i64: 16, 128>}, {transform_indices = @transform_6, window_bounds = array<i64: 16, 128>}]} {
    %c0_i32 = arith.constant 0 : i32
    %0 = arith.cmpi eq, %arg1, %c0_i32 : i32
    %1 = arith.extui %0 : i1 to i32
    %c0_i32_0 = arith.constant 0 : i32
    %2 = arith.cmpi ne, %1, %c0_i32_0 : i32
    scf.if %2 {
      %c0_10 = arith.constant 0 : index
      %c0_11 = arith.constant 0 : index
      %13 = vector.load %arg3[%c0_10, %c0_11] : memref<16x128xf32, #tpu.memory_space<vmem>>, vector<16x128xf32>
      %c0_12 = arith.constant 0 : index
      %c0_13 = arith.constant 0 : index
      %14 = vector.load %arg7[%c0_12, %c0_13] : memref<16x128xf32, #tpu.memory_space<vmem>>, vector<16x128xf32>
      tpu.vector_store %arg7[%c0_12, %c0_13], %13 {strides = array<i32>} : memref<16x128xf32, #tpu.memory_space<vmem>>, vector<16x128xf32>,
    } else {
    }
    %c0 = arith.constant 0 : index
    %c0_1 = arith.constant 0 : index
    %3 = vector.load %arg7[%c0, %c0_1] : memref<16x128xf32, #tpu.memory_space<vmem>>, vector<16x128xf32>
    %c0_2 = arith.constant 0 : index
    %c0_3 = arith.constant 0 : index
    %c0_4 = arith.constant 0 : index
    %4 = vector.load %arg2[%c0_2, %c0_3, %c0_4] : memref<1x16x16xbf16, #tpu.memory_space<vmem>>, vector<1x16x16xbf16>
    %5 = vector.shape_cast %4 : vector<1x16x16xbf16> to vector<16x16xbf16>
    %c0_5 = arith.constant 0 : index
    %c0_6 = arith.constant 0 : index
    %6 = vector.load %arg4[%c0_5, %c0_6] : memref<16x128xbf16, #tpu.memory_space<vmem>>, vector<16x128xbf16>
    %cst = arith.constant dense<0.000000e+00> : vector<16x128xf32>
    %7 = tpu.matmul %5, %6, %cst {dimension_numbers = #tpu.dot_dimension_numbers<[1], [0], [0], [1], [0, 0, 1, 1], [], []>} : vector<16x16xbf16>, vector<16x128xbf16>, vector<16x128xf32> -> vector<16x128xf32>
    %8 = arith.addf %3, %7 : vector<16x128xf32>
    %c0_7 = arith.constant 0 : index
    %c0_8 = arith.constant 0 : index
    %9 = vector.load %arg7[%c0_7, %c0_8] : memref<16x128xf32, #tpu.memory_space<vmem>>, vector<16x128xf32>
    tpu.vector_store %arg7[%c0_7, %c0_8], %8 {strides = array<i32>} : memref<16x128xf32, #tpu.memory_space<vmem>>, vector<16x128xf32>,
    %c2_i32 = arith.constant 2 : i32
    %10 = arith.cmpi eq, %arg1, %c2_i32 : i32
    %11 = arith.extui %10 : i1 to i32
    %c0_i32_9 = arith.constant 0 : i32
    %12 = arith.cmpi ne, %11, %c0_i32_9 : i32
    scf.if %12 {
      %c0_10 = arith.constant 0 : index
      %c0_11 = arith.constant 0 : index
      %13 = vector.load %arg7[%c0_10, %c0_11] : memref<16x128xf32, #tpu.memory_space<vmem>>, vector<16x128xf32>
      %c0_12 = arith.constant 0 : index
      %c0_13 = arith.constant 0 : index
      %14 = vector.load %arg5[%c0_12, %c0_13] : memref<128x128xf32, #tpu.memory_space<vmem>>, vector<128x128xf32>
      %cst_14 = arith.constant dense<0.000000e+00> : vector<16x128xf32>
      %15 = tpu.matmul %13, %14, %cst_14 {dimension_numbers = #tpu.dot_dimension_numbers<[1], [0], [0], [1], [0, 0, 1, 1], [], []>} : vector<16x128xf32>, vector<128x128xf32>, vector<16x128xf32> -> vector<16x128xf32>
      %c0_15 = arith.constant 0 : index
      %c0_16 = arith.constant 0 : index
      %16 = vector.load %arg6[%c0_15, %c0_16] : memref<1x128xf32, #tpu.memory_space<vmem>>, vector<1x128xf32>
      %17 = vector.broadcast %16 : vector<1x128xf32> to vector<16x128xf32>
      %18 = arith.addf %15, %17 : vector<16x128xf32>
      %c0_17 = arith.constant 0 : index
      %c0_18 = arith.constant 0 : index
      %19 = vector.load %arg8[%c0_17, %c0_18] : memref<16x128xf32, #tpu.memory_space<vmem>>, vector<16x128xf32>
      tpu.vector_store %arg8[%c0_17, %c0_18], %18 {strides = array<i32>} : memref<16x128xf32, #tpu.memory_space<vmem>>, vector<16x128xf32>,
    } else {
    }
    return
  }
  func.func @transform_0(%arg0: i32, %arg1: i32) -> (i32, i32, i32) {
    %c0_i32 = arith.constant 0 : i32
    %c0_i32_0 = arith.constant 0 : i32
    return %arg1, %arg0, %c0_i32 : i32, i32, i32
  }
  func.func @transform_1(%arg0: i32, %arg1: i32) -> (i32, i32) {
    %c0_i32 = arith.constant 0 : i32
    %c0_i32_0 = arith.constant 0 : i32
    return %arg0, %c0_i32 : i32, i32
  }
  func.func @transform_2(%arg0: i32, %arg1: i32) -> (i32, i32) {
    %c0_i32 = arith.constant 0 : i32
    %c0_i32_0 = arith.constant 0 : i32
    return %c0_i32, %arg1 : i32, i32
  }
  func.func @transform_3(%arg0: i32, %arg1: i32) -> (i32, i32) {
    %c0_i32 = arith.constant 0 : i32
    %c0_i32_0 = arith.constant 0 : i32
    %c0_i32_1 = arith.constant 0 : i32
    return %c0_i32, %c0_i32_0 : i32, i32
  }
  func.func @transform_4(%arg0: i32, %arg1: i32) -> (i32, i32) {
    %c0_i32 = arith.constant 0 : i32
    %c0_i32_0 = arith.constant 0 : i32
    %c0_i32_1 = arith.constant 0 : i32
    return %c0_i32, %c0_i32_0 : i32, i32
  }
  func.func @transform_5(%arg0: i32, %arg1: i32) -> (i32, i32) {
    %c0_i32 = arith.constant 0 : i32
    %c0_i32_0 = arith.constant 0 : i32
    return %arg0, %c0_i32 : i32, i32
  }
  func.func @transform_6(%arg0: i32, %arg1: i32) -> (i32, i32) {
    %c0_i32 = arith.constant 0 : i32
    %c0_i32_0 = arith.constant 0 : i32
    return %arg0, %c0_i32 : i32, i32
  }
}

</mosaic_0001>

<llo_original>
// kernel: rgcn_forward.4
$region0: #{rgcn_forward.4}
  #allocation0 [shape = 'u32[]', space=smem, size = 0x4, offset = 0x4, fixed_abs, tag = 'smem constant byte address 0x4 - core index']
  #allocation1 [shape = 'u32[72,128]{1,0:T(1,128)}', space=vmem, size = 0x9000, scoped, tag = 'internal scratch']
  %s0 = inlined_call_operand.vmem [shape: f32[16,8], index: 0, kind: input, shape index: {}]
  %s1 = inlined_call_operand.vmem [shape: f32[8,512], index: 1, kind: input, shape index: {}]
  %s2 = inlined_call_operand.vmem [shape: f32[1,128], index: 2, kind: input, shape index: {}]
  %s3 = inlined_call_operand.vmem [shape: f32[16,128], index: 3, kind: output, shape index: {0}]
  %s4 = inlined_call_operand.vmem [shape: bf16[16,384], index: 4, kind: output, shape index: {1}]
  %5 = xla_tuple %s3, %s4
  %s6 = sld [smem:[#allocation0]]
  $region30: #{rgcn_forward.4} parent=0
    _
  %s8 = ssub.s32 1, %s6
  %s9 = scalar_select 0, %s8, %s6
  // Predicated region
  $region2: #{rgcn_forward.4} parent=0 // pred_check
    _
  $region3: #{rgcn_forward.4} parent=0 // pred_check_branch
    %11 = sbr.rel (0) target = $region5
  $region4: #{rgcn_forward.4} parent=0 // pred_region
    _
  $region5: #{rgcn_forward.4} parent=0 // pred_fallthru
    _
  // Predicated region
  $region6: #{rgcn_forward.4} parent=0 // pred_check
    _
  $region7: #{rgcn_forward.4} parent=0 // pred_check_branch
    %13 = sbr.rel (0) target = $region9
  $region8: #{rgcn_forward.4} parent=0 // pred_region
    _
  $region9: #{rgcn_forward.4} parent=0 // pred_fallthru
    _
  // Predicated region
  $region10: #{rgcn_forward.4} parent=0 // pred_check
    _
  $region11: #{rgcn_forward.4} parent=0 // pred_check_branch
    %15 = sbr.rel (0) target = $region13
  $region12: #{rgcn_forward.4} parent=0 // pred_region
    _
  $region13: #{rgcn_forward.4} parent=0 // pred_fallthru
    _
  %v16 = vld [vmem:[%s0] sm:$0xff]
  %v17 = vld [vmem:[%s0 + $0x8] sm:$0xff]
  %v18 = vld [vmem:[%s1] sm:$0xff]
  %v19 = vld [vmem:[%s1 + $0x8] sm:$0xff]
  %v20 = vld [vmem:[%s1 + $0x10] sm:$0xff]
  %v21 = vld [vmem:[%s1 + $0x18] sm:$0xff]
  %vm22 = vcmask 64512
  %v24 = vsel %vm22, %v16, 0
  %v27 = vsel %vm22, %v17, 0
  %29 = vmatpush.msra.mxu0 0.0
  %30 = vmatpush.msra.mxu0 0.0
  %31 = vmatpush.msra.mxu0 0.0
  %32 = vmatpush.msra.mxu0 0.0
  %33 = vmatpush.msra.mxu0 0.0
  %34 = vmatpush.msra.mxu0 0.0
  %35 = vmatpush.msra.mxu0 0.0
  %36 = vmatpush.msra.mxu0 0.0
  %37 = vmatpush.msra.mxu0 0.0
  %38 = vmatpush.msra.mxu0 0.0
  %39 = vmatpush.msra.mxu0 0.0
  %40 = vmatpush.msra.mxu0 0.0
  %41 = vmatpush.msra.mxu0 0.0
  %42 = vmatpush.msra.mxu0 0.0
  %43 = vmatpush.msra.mxu0 0.0
  %44 = vmatpush.msra.mxu0 %v18
  %45 = vmatmul.f32.gmra.mxu0 %v24
  %v46 = vpop.f32.mrf.mxu0
  %v47 = vadd.f32 0.0, %v46
  %48 = vmatmul.f32.gmra.mxu0 %v27
  %v49 = vpop.f32.mrf.mxu0
  %v50 = vadd.f32 0.0, %v49
  %51 = vdwg.mxu0
  %52 = vmatpush.msra.mxu0 0.0
  %53 = vmatpush.msra.mxu0 0.0
  %54 = vmatpush.msra.mxu0 0.0
  %55 = vmatpush.msra.mxu0 0.0
  %56 = vmatpush.msra.mxu0 0.0
  %57 = vmatpush.msra.mxu0 0.0
  %58 = vmatpush.msra.mxu0 0.0
  %59 = vmatpush.msra.mxu0 0.0
  %60 = vmatpush.msra.mxu0 0.0
  %61 = vmatpush.msra.mxu0 0.0
  %62 = vmatpush.msra.mxu0 0.0
  %63 = vmatpush.msra.mxu0 0.0
  %64 = vmatpush.msra.mxu0 0.0
  %65 = vmatpush.msra.mxu0 0.0
  %66 = vmatpush.msra.mxu0 0.0
  %67 = vmatpush.msra.mxu0 %v19
  %68 = vmatmul.f32.gmra.mxu0 %v24
  %v69 = vpop.f32.mrf.mxu0
  %v70 = vadd.f32 0.0, %v69
  %71 = vmatmul.f32.gmra.mxu0 %v27
  %v72 = vpop.f32.mrf.mxu0
  %v73 = vadd.f32 0.0, %v72
  %74 = vdwg.mxu0
  %75 = vmatpush.msra.mxu0 0.0
  %76 = vmatpush.msra.mxu0 0.0
  %77 = vmatpush.msra.mxu0 0.0
  %78 = vmatpush.msra.mxu0 0.0
  %79 = vmatpush.msra.mxu0 0.0
  %80 = vmatpush.msra.mxu0 0.0
  %81 = vmatpush.msra.mxu0 0.0
  %82 = vmatpush.msra.mxu0 0.0
  %83 = vmatpush.msra.mxu0 0.0
  %84 = vmatpush.msra.mxu0 0.0
  %85 = vmatpush.msra.mxu0 0.0
  %86 = vmatpush.msra.mxu0 0.0
  %87 = vmatpush.msra.mxu0 0.0
  %88 = vmatpush.msra.mxu0 0.0
  %89 = vmatpush.msra.mxu0 0.0
  %90 = vmatpush.msra.mxu0 %v20
  %91 = vmatmul.f32.gmra.mxu0 %v24
  %v92 = vpop.f32.mrf.mxu0
  %v93 = vadd.f32 0.0, %v92
  %94 = vmatmul.f32.gmra.mxu0 %v27
  %v95 = vpop.f32.mrf.mxu0
  %v96 = vadd.f32 0.0, %v95
  %97 = vdwg.mxu0
  %98 = vmatpush.msra.mxu0 0.0
  %99 = vmatpush.msra.mxu0 0.0
  %100 = vmatpush.msra.mxu0 0.0
  %101 = vmatpush.msra.mxu0 0.0
  %102 = vmatpush.msra.mxu0 0.0
  %103 = vmatpush.msra.mxu0 0.0
  %104 = vmatpush.msra.mxu0 0.0
  %105 = vmatpush.msra.mxu0 0.0
  %106 = vmatpush.msra.mxu0 0.0
  %107 = vmatpush.msra.mxu0 0.0
  %108 = vmatpush.msra.mxu0 0.0
  %109 = vmatpush.msra.mxu0 0.0
  %110 = vmatpush.msra.mxu0 0.0
  %111 = vmatpush.msra.mxu0 0.0
  %112 = vmatpush.msra.mxu0 0.0
  %113 = vmatpush.msra.mxu0 %v21
  %114 = vmatmul.f32.gmra.mxu0 %v24
  %v115 = vpop.f32.mrf.mxu0
  %v116 = vadd.f32 0.0, %v115
  %117 = vmatmul.f32.gmra.mxu0 %v27
  %v118 = vpop.f32.mrf.mxu0
  %v119 = vadd.f32 0.0, %v118
  %120 = vdwg.mxu0
  %v121 = vld [vmem:[%s2] sm:$0x1]
  %v123 = vperm.slane %v121, 0
  %v125 = vadd.f32 %v47, %v123
  %v126 = vadd.f32 %v50, %v123
  %127 = vst [vmem:[%s3] sm:$0xff] %v125
  %128 = vst [vmem:[%s3 + $0x8] sm:$0xff] %v126
  %v129 = vpack.c.bf16 %v93, %v70
  %v130 = vpack.c.bf16 %v116, %v116
  %v131 = vpack.c.bf16 %v96, %v73
  %v132 = vpack.c.bf16 %v119, %v119
  %133 = vst [vmem:[%s4] sm:$0xff] %v129
  %134 = vst [vmem:[%s4 + $0x8] sm:$0xf] %v130
  %135 = vst [vmem:[%s4 + $0xc] sm:$0xff] %v131
  %136 = vst [vmem:[%s4 + $0x14] sm:$0xf] %v132
  // Predicated region
  $region14: #{rgcn_forward.4} parent=0 // pred_check
    _
  $region15: #{rgcn_forward.4} parent=0 // pred_check_branch
    %138 = sbr.rel (0) target = $region17
  $region16: #{rgcn_forward.4} parent=0 // pred_region
    _
  $region17: #{rgcn_forward.4} parent=0 // pred_fallthru
    _
  // Predicated region
  $region18: #{rgcn_forward.4} parent=0 // pred_check
    _
  $region19: #{rgcn_forward.4} parent=0 // pred_check_branch
    %140 = sbr.rel (0) target = $region21
  $region20: #{rgcn_forward.4} parent=0 // pred_region
    _
  $region21: #{rgcn_forward.4} parent=0 // pred_fallthru
    _
  // Predicated region
  $region22: #{rgcn_forward.4} parent=0 // pred_check
    _
  $region23: #{rgcn_forward.4} parent=0 // pred_check_branch
    %142 = sbr.rel (0) target = $region25
  $region24: #{rgcn_forward.4} parent=0 // pred_region
    _
  $region25: #{rgcn_forward.4} parent=0 // pred_fallthru
    _
  // Predicated region
  $region26: #{rgcn_forward.4} parent=0 // pred_check
    _
  $region27: #{rgcn_forward.4} parent=0 // pred_check_branch
    %144 = sbr.rel (0) target = $region29
  $region28: #{rgcn_forward.4} parent=0 // pred_region
    _
  $region29: #{rgcn_forward.4} parent=0 // pred_fallthru
    _

// kernel: rgcn_forward.5
$region0: #{rgcn_forward.5}
  #allocation0 [shape = 'u32[]', space=smem, size = 0x4, offset = 0x4, fixed_abs, tag = 'smem constant byte address 0x4 - core index']
  #allocation1 [shape = 'u32[72,128]{1,0:T(1,128)}', space=vmem, size = 0x9000, scoped, tag = 'internal scratch']
  %s0 = inlined_call_operand.vmem [shape: bf16[3,16,16], index: 0, kind: input, shape index: {}]
  %s1 = inlined_call_operand.vmem [shape: f32[16,128], index: 1, kind: input, shape index: {}]
  %s2 = inlined_call_operand.vmem [shape: bf16[16,384], index: 2, kind: input, shape index: {}]
  %s3 = inlined_call_operand.vmem [shape: f32[16,128], index: 3, kind: output, shape index: {}]
  %s4 = sld [smem:[#allocation0]]
  $region94: #{rgcn_forward.5} parent=0
    _
  %s6 = ssub.s32 1, %s4
  %s7 = scalar_select 0, %s6, %s4
  $region1: #{rgcn_forward.5} parent=0
    #allocation2 [shape = 'u8[8192]{0}', space=vmem, size = 0x2000, scoped, tag = 'input window, operand 2']
    loop: start=0, step=1, limit=5
    $region2: #{rgcn_forward.5} parent=1 // loop_pre_header
      _
    $region3: #{rgcn_forward.5} parent=1 // loop_header
      %s9 = sphi 0, %s13
      %p10 = scmp.ge.s32.totalorder %s9, 5
      %s16 = sphi 0, %s28
      %s17 = sphi 0, %s24
      %s18 = sphi 0, %s16
      %s19 = sphi 0, %s17
      %s20 = sphi 0, %s18
      %s21 = sphi 0, %s19
      %s33 = sphi 0, %s35
      %s36 = sphi 0, %s33
      %s37 = sphi 0, %s36
      %s53 = sphi 0, %s37
      %s59 = sphi 0, %s61
      %s62 = sphi 0, %s59
      %s63 = sphi 0, %s62
      %s79 = sphi 0, %s63
      %s85 = sphi 0, %s87
      %s88 = sphi 0, %s85
      %s89 = sphi 0, %s88
      %s105 = sphi 0, %s89
      %s111 = sphi 0, %s113
      %s114 = sphi 0, %s111
      %s115 = sphi 0, %s114
      %s131 = sphi 0, %s115
    $region4: #{rgcn_forward.5} parent=1 // loop_header_branch
      %12 = sbr.rel (%p10) target = $region8
    $region5: #{rgcn_forward.5} parent=1 // loop_body
      %s14 = ssub.s32 %s9, 1
      %s15 = ssub.s32 %s9, 2
      %s22 = sadd.s32 1, %s17
      %p23 = scmp.ge.s32.totalorder %s22, 3
      %s24 = scalar_select %p23, 0, %s22
      %s25 = sadd.s32 1, %s16
      %s26 = scalar_select %p23, %s25, %s16
      %p27 = scmp.ge.s32.totalorder %s26, 1
      %s28 = scalar_select %p27, 0, %s26
      %s29 = ssub.s32 %s17, %s24
      %s30 = ssub.s32 %s16, %s28
      %s31 = sor.u32 %s29, %s30
      %p32 = scmp.eq.s32.totalorder %s31, 0
      %s34 = sadd.s32 %s33, 1
      %s35 = scalar_select %p32, %s33, %s34
      %p38 = pneg %p32
      %p39 = scmp.eq.s32.totalorder %s9, 2
      %p40 = por %p38, %p39
      %p41 = scmp.ne.s32.totalorder %s33, %s36
      %p42 = scmp.eq.s32.totalorder %s9, 0
      %p43 = por %p41, %p42
      %p44 = scmp.ne.s32.totalorder %s33, %s36
      %p45 = scmp.eq.s32.totalorder %s14, 2
      %p46 = por %p44, %p45
      %p47 = scmp.ne.s32.totalorder %s36, %s37
      %p48 = scmp.eq.s32.totalorder %s14, 0
      %p49 = por %p47, %p48
      %p50 = scmp.ne.s32.totalorder %s36, %s37
      %p51 = scmp.eq.s32.totalorder %s15, 2
      %p52 = por %p50, %p51
      %p54 = scmp.ne.s32.totalorder %s37, %s53
      %p55 = scmp.eq.s32.totalorder %s15, 0
      %p56 = por %p54, %p55
      %s57 = ssub.s32 %s16, %s28
      %p58 = scmp.eq.s32.totalorder %s57, 0
      %s60 = sadd.s32 %s59, 1
      %s61 = scalar_select %p58, %s59, %s60
      %p64 = pneg %p58
      %p65 = scmp.eq.s32.totalorder %s9, 2
      %p66 = por %p64, %p65
      %p67 = scmp.ne.s32.totalorder %s59, %s62
      %p68 = scmp.eq.s32.totalorder %s9, 0
      %p69 = por %p67, %p68
      %p70 = scmp.ne.s32.totalorder %s59, %s62
      %p71 = scmp.eq.s32.totalorder %s14, 2
      %p72 = por %p70, %p71
      %p73 = scmp.ne.s32.totalorder %s62, %s63
      %p74 = scmp.eq.s32.totalorder %s14, 0
      %p75 = por %p73, %p74
      %p76 = scmp.ne.s32.totalorder %s62, %s63
      %p77 = scmp.eq.s32.totalorder %s15, 2
      %p78 = por %p76, %p77
      %p80 = scmp.ne.s32.totalorder %s63, %s79
      %p81 = scmp.eq.s32.totalorder %s15, 0
      %p82 = por %p80, %p81
      %s83 = ssub.s32 %s17, %s24
      %p84 = scmp.eq.s32.totalorder %s83, 0
      %s86 = sadd.s32 %s85, 1
      %s87 = scalar_select %p84, %s85, %s86
      %p90 = pneg %p84
      %p91 = scmp.eq.s32.totalorder %s9, 2
      %p92 = por %p90, %p91
      %p93 = scmp.ne.s32.totalorder %s85, %s88
      %p94 = scmp.eq.s32.totalorder %s9, 0
      %p95 = por %p93, %p94
      %p96 = scmp.ne.s32.totalorder %s85, %s88
      %p97 = scmp.eq.s32.totalorder %s14, 2
      %p98 = por %p96, %p97
      %p99 = scmp.ne.s32.totalorder %s88, %s89
      %p100 = scmp.eq.s32.totalorder %s14, 0
      %p101 = por %p99, %p100
      %p102 = scmp.ne.s32.totalorder %s88, %s89
      %p103 = scmp.eq.s32.totalorder %s15, 2
      %p104 = por %p102, %p103
      %p106 = scmp.ne.s32.totalorder %s89, %s105
      %p107 = scmp.eq.s32.totalorder %s15, 0
      %p108 = por %p106, %p107
      %s109 = ssub.s32 %s16, %s28
      %p110 = scmp.eq.s32.totalorder %s109, 0
      %s112 = sadd.s32 %s111, 1
      %s113 = scalar_select %p110, %s111, %s112
      %p116 = pneg %p110
      %p117 = scmp.eq.s32.totalorder %s9, 2
      %p118 = por %p116, %p117
      %p119 = scmp.ne.s32.totalorder %s111, %s114
      %p120 = scmp.eq.s32.totalorder %s9, 0
      %p121 = por %p119, %p120
      %p122 = scmp.ne.s32.totalorder %s111, %s114
      %p123 = scmp.eq.s32.totalorder %s14, 2
      %p124 = por %p122, %p123
      %p125 = scmp.ne.s32.totalorder %s114, %s115
      %p126 = scmp.eq.s32.totalorder %s14, 0
      %p127 = por %p125, %p126
      %p128 = scmp.ne.s32.totalorder %s114, %s115
      %p129 = scmp.eq.s32.totalorder %s15, 2
      %p130 = por %p128, %p129
      %p132 = scmp.ne.s32.totalorder %s115, %s131
      %p133 = scmp.eq.s32.totalorder %s15, 0
      %p134 = por %p132, %p133
      %p135 = scmp.le.s32.totalorder 1, %s9
      %p136 = scmp.lt.s32.totalorder %s9, 4
      %p137 = pnand %p135, %p136
      %p138 = pneg %p137
      // Predicated region
      $region9: #{rgcn_forward.5} parent=5 // pred_check
        _
      $region10: #{rgcn_forward.5} parent=5 // pred_check_branch
        %140 = sbr.rel (%p137) target = $region12
      $region11: #{rgcn_forward.5} parent=5 // pred_region
        %s141 = ssub.s32 %s9, 1
        // Predicated region
        $region13: #{rgcn_forward.5} parent=11 // pred_check
          %p142 = pneg %p75
        $region14: #{rgcn_forward.5} parent=11 // pred_check_branch
          %144 = sbr.rel (%p142) target = $region16
        $region15: #{rgcn_forward.5} parent=11 // pred_region
          %s145 = smul.u32 2, %s18
          %p146 = scmp.lt.s32.totalorder %s145, 1
          %s147 = scalar_select %p146, %s145, 1
          %s148 = smul.addr %s147, 8
          %s149 = scalar_lea.vmem %s1, %s148
          %s150 = smul.u32 2, %s18
        $region16: #{rgcn_forward.5} parent=11 // pred_fallthru
          _
      $region12: #{rgcn_forward.5} parent=5 // pred_fallthru
        _
      %p151 = scmp.lt.s32.totalorder %s9, 3
      // Predicated region
      $region17: #{rgcn_forward.5} parent=5 // pred_check
        %p152 = pneg %p151
      $region18: #{rgcn_forward.5} parent=5 // pred_check_branch
        %154 = sbr.rel (%p152) target = $region20
      $region19: #{rgcn_forward.5} parent=5 // pred_region
        // Predicated region
        $region21: #{rgcn_forward.5} parent=19 // pred_check
          %p155 = pneg %p43
        $region22: #{rgcn_forward.5} parent=19 // pred_check_branch
          %157 = sbr.rel (%p155) target = $region24
        $region23: #{rgcn_forward.5} parent=19 // pred_region
          %s158 = smul.u32 2, %s16
          %p159 = scmp.lt.s32.totalorder %s17, 2
          %s160 = scalar_select %p159, %s17, 2
          %p161 = scmp.lt.s32.totalorder %s158, 1
          %s162 = scalar_select %p161, %s158, 1
          %s163 = smul.addr %s160, 2
          %s164 = sadd.s32 %s162, %s163
          %s165 = smul.addr %s164, 4
          %s166 = scalar_lea.vmem %s0, %s165
          %s167 = smul.u32 2, %s16
        $region24: #{rgcn_forward.5} parent=19 // pred_fallthru
          _
        // Predicated region
        $region25: #{rgcn_forward.5} parent=19 // pred_check
          %p168 = pneg %p95
        $region26: #{rgcn_forward.5} parent=19 // pred_check_branch
          %170 = sbr.rel (%p168) target = $region28
        $region27: #{rgcn_forward.5} parent=19 // pred_region
          %s171 = sand.u32 %s85, 1
          %s172 = sand.u32 %s85, 1
          %s173 = smul.addr %s172, 8
          %s174 = scalar_lea.vmem [#allocation2], %s173
          %s175 = smul.addr %s17, 4
          %s176 = scalar_lea.vmem %s2, %s175
          // Predicated region
          $region29: #{rgcn_forward.5} parent=27 // pred_check
            _
          $region30: #{rgcn_forward.5} parent=27 // pred_check_branch
            %178 = sbr.rel (0) target = $region32
          $region31: #{rgcn_forward.5} parent=27 // pred_region
            // Predicated region
            $region33: #{rgcn_forward.5} parent=31 // pred_check
              _
            $region34: #{rgcn_forward.5} parent=31 // pred_check_branch
              %180 = sbr.rel target = $region36
            $region35: #{rgcn_forward.5} parent=31 // pred_region
              // Predicated region
              $region48: #{rgcn_forward.5} parent=35 // pred_check
                _
              $region49: #{rgcn_forward.5} parent=35 // pred_check_branch
                %198 = sbr.rel (0) target = $region51
              $region50: #{rgcn_forward.5} parent=35 // pred_region
                loop: start=0, step=1, limit=1
                $region52: #{rgcn_forward.5} parent=50 // loop_pre_header
                  _
                $region53: #{rgcn_forward.5} parent=50 // loop_header
                  %s200 = sphi 0, %s204
                  %p201 = scmp.ge.s32.totalorder %s200, 1
                  %s205 = sphi %s176, %s176
                  %s206 = sphi %s174, %s174
                $region54: #{rgcn_forward.5} parent=50 // loop_header_branch
                  %203 = sbr.rel (%p201) target = $region58
                $region55: #{rgcn_forward.5} parent=50 // loop_body
                  _
                $region56: #{rgcn_forward.5} parent=50 // loop_footer
                  %s204 = sadd.s32 1, %s200
                $region57: #{rgcn_forward.5} parent=50 // loop_footer_branch
                  %199 = sbr.rel target = $region53
                $region58: #{rgcn_forward.5} parent=50 // loop_exit
                  _
                %s208 = ssub.s32 16, 1
                loop: start=0, step=1, limit=1
                $region59: #{rgcn_forward.5} parent=50 // loop_pre_header
                  _
                $region60: #{rgcn_forward.5} parent=50 // loop_header
                  %s210 = sphi 0, %s214
                  %p211 = scmp.ge.s32.totalorder %s210, 1
                  %s215 = sphi %s176, %s176
                  %s216 = sphi %s174, %s174
                $region61: #{rgcn_forward.5} parent=50 // loop_header_branch
                  %213 = sbr.rel (%p211) target = $region65
                $region62: #{rgcn_forward.5} parent=50 // loop_body
                  %v217 = vld [vmem:[%s215] sm:%s208]
                  %218 = vst [vmem:[%s216] sm:%s208] %v217
                  %v219 = vld [vmem:[%s215 + $0xc] sm:%s208]
                  %220 = vst [vmem:[%s216 + $0x4] sm:%s208] %v219
                $region63: #{rgcn_forward.5} parent=50 // loop_footer
                  %s214 = sadd.s32 1, %s210
                $region64: #{rgcn_forward.5} parent=50 // loop_footer_branch
                  %209 = sbr.rel target = $region60
                $region65: #{rgcn_forward.5} parent=50 // loop_exit
                  _
              $region51: #{rgcn_forward.5} parent=35 // pred_fallthru
                _
            $region36: #{rgcn_forward.5} parent=31 // pred_fallthru
              _
            // Predicated region
            $region37: #{rgcn_forward.5} parent=31 // pred_check
              _
            $region38: #{rgcn_forward.5} parent=31 // pred_check_branch
              %182 = sbr.rel (0) target = $region40
            $region39: #{rgcn_forward.5} parent=31 // pred_region
              %s184 = ssub.s32 16, 1
              loop: start=0, step=1, limit=1
              $region41: #{rgcn_forward.5} parent=39 // loop_pre_header
                _
              $region42: #{rgcn_forward.5} parent=39 // loop_header
                %s186 = sphi 0, %s190
                %p187 = scmp.ge.s32.totalorder %s186, 1
                %s191 = sphi %s176, %s176
                %s192 = sphi %s174, %s174
              $region43: #{rgcn_forward.5} parent=39 // loop_header_branch
                %189 = sbr.rel (%p187) target = $region47
              $region44: #{rgcn_forward.5} parent=39 // loop_body
                %v193 = vld [vmem:[%s191] sm:%s184]
                %194 = vst [vmem:[%s192] sm:%s184] %v193
                %v195 = vld [vmem:[%s191 + $0xc] sm:%s184]
                %196 = vst [vmem:[%s192 + $0x4] sm:%s184] %v195
              $region45: #{rgcn_forward.5} parent=39 // loop_footer
                %s190 = sadd.s32 1, %s186
              $region46: #{rgcn_forward.5} parent=39 // loop_footer_branch
                %185 = sbr.rel target = $region42
              $region47: #{rgcn_forward.5} parent=39 // loop_exit
                _
            $region40: #{rgcn_forward.5} parent=31 // pred_fallthru
              _
          $region32: #{rgcn_forward.5} parent=27 // pred_fallthru
            _
          %221 = vnop
        $region28: #{rgcn_forward.5} parent=19 // pred_fallthru
          _
      $region20: #{rgcn_forward.5} parent=5 // pred_fallthru
        _
      %p222 = scmp.le.s32.totalorder 1, %s9
      %p223 = scmp.lt.s32.totalorder %s9, 4
      %p224 = pnand %p222, %p223
      %p225 = pneg %p224
      // Predicated region
      $region66: #{rgcn_forward.5} parent=5 // pred_check
        _
      $region67: #{rgcn_forward.5} parent=5 // pred_check_branch
        %227 = sbr.rel (%p224) target = $region69
      $region68: #{rgcn_forward.5} parent=5 // pred_region
        %s228 = ssub.s32 %s9, 1
        %s229 = sand.u32 %s88, 1
        %s230 = sand.u32 %s88, 1
        %s231 = smul.addr %s230, 8
        %s232 = scalar_lea.vmem [#allocation2], %s231
        // Predicated region
        $region70: #{rgcn_forward.5} parent=68 // pred_check
          %p233 = pneg %p101
        $region71: #{rgcn_forward.5} parent=68 // pred_check_branch
          %235 = sbr.rel (%p233) target = $region73
        $region72: #{rgcn_forward.5} parent=68 // pred_region
          _
        $region73: #{rgcn_forward.5} parent=68 // pred_fallthru
          _
        %s236 = smul.u32 2, %s18
        %p237 = scmp.lt.s32.totalorder %s19, 2
        %s238 = scalar_select %p237, %s19, 2
        %p239 = scmp.lt.s32.totalorder %s236, 1
        %s240 = scalar_select %p239, %s236, 1
        %s241 = smul.addr %s238, 2
        %s242 = sadd.s32 %s240, %s241
        %s243 = smul.addr %s242, 4
        %s244 = scalar_lea.vmem %s0, %s243
        %p245 = pneg %p49
        %p246 = pneg %p46
        %s247 = smul.u32 2, %s18
        %p248 = scmp.lt.s32.totalorder %s247, 1
        %s249 = scalar_select %p248, %s247, 1
        %s250 = smul.addr %s249, 8
        %s251 = scalar_lea.vmem %s1, %s250
        %p252 = pneg %p75
        %p253 = pneg %p72
        %s254 = sand.u32 %s88, 1
        %s255 = sand.u32 %s88, 1
        %s256 = smul.addr %s255, 8
        %s257 = scalar_lea.vmem [#allocation2], %s256
        %p258 = pneg %p101
        %p259 = pneg %p98
        %p260 = pneg %p127
        %p261 = pneg %p124
        %s262 = smul.u32 2, %s18
        %p263 = scmp.lt.s32.totalorder %s262, 1
        %s264 = scalar_select %p263, %s262, 1
        %s265 = smul.addr %s264, 8
        %s266 = scalar_lea.vmem %s3, %s265
        %s267 = smul.u32 2, %s18
        %p268 = scmp.lt.s32.totalorder %s19, 2
        %s269 = scalar_select %p268, %s19, 2
        %p270 = scmp.lt.s32.totalorder %s267, 1
        %s271 = scalar_select %p270, %s267, 1
        %s272 = smul.addr %s269, 2
        %s273 = sadd.s32 %s271, %s272
        %s274 = smul.addr %s273, 4
        %s275 = scalar_lea.vmem %s0, %s274
        %s276 = smul.u32 2, %s18
        %s277 = smul.u32 2, %s18
        %p278 = scmp.lt.s32.totalorder %s277, 1
        %s279 = scalar_select %p278, %s277, 1
        %s280 = smul.addr %s279, 8
        %s281 = scalar_lea.vmem %s1, %s280
        %s282 = smul.u32 2, %s18
        %s283 = smul.u32 2, %s18
        %p284 = scmp.lt.s32.totalorder %s283, 1
        %s285 = scalar_select %p284, %s283, 1
        %s286 = smul.addr %s285, 8
        %s287 = scalar_lea.vmem %s3, %s286
        %s288 = smul.u32 2, %s18
        %p290 = scmp.eq.s32.totalorder %s19, 0
        // Predicated region
        $region74: #{rgcn_forward.5} parent=68 // pred_check
          %p291 = pneg %p290
        $region75: #{rgcn_forward.5} parent=68 // pred_check_branch
          %293 = sbr.rel (%p291) target = $region77
        $region76: #{rgcn_forward.5} parent=68 // pred_region
          %v294 = vld [vmem:[%s281] sm:$0xff]
          %v295 = vld [vmem:[%s281 + $0x8] sm:$0xff]
          %296 = vst [vmem:[%s287] sm:$0xff] %v294
          %297 = vst [vmem:[%s287 + $0x8] sm:$0xff] %v295
        $region77: #{rgcn_forward.5} parent=68 // pred_fallthru
          _
        %v298 = vld [vmem:[%s287] sm:$0xff]
        %v299 = vld [vmem:[%s287 + $0x8] sm:$0xff]
        %v300 = vld [vmem:[%s275] sm:$0xf]
        %v301 = vld [vmem:[%s275 + $0x4] sm:$0xf]
        %v302 = vld [vmem:[%s232] sm:$0xf]
        %v303 = vld [vmem:[%s232 + $0x4] sm:$0xf]
        %v306 = vunpack.c.l.b16 %v300
        %v307 = vunpack.c.l.b16 %v301
        %v308 = vpack.c.b16 %v307, %v306
        %v311 = vunpack.c.l.b16 %v302
        %v312 = vunpack.c.l.b16 %v303
        %v313 = vpack.c.b16 %v312, %v311
        %vm315 = vcmask 130048
        %v317 = vsel %vm315, %v308, 0
        %319 = vmatpush.bf16.msra.mxu0 0
        %320 = vmatpush.bf16.msra.mxu0 0
        %321 = vmatpush.bf16.msra.mxu0 0
        %322 = vmatpush.bf16.msra.mxu0 0
        %323 = vmatpush.bf16.msra.mxu0 0
        %324 = vmatpush.bf16.msra.mxu0 0
        %325 = vmatpush.bf16.msra.mxu0 0
        %326 = vmatpush.bf16.msra.mxu0 %v313
        %327 = vmatmul.bf16.gmra.mxu0 %v317
        %v328 = vpop.f32.mrf.mxu0
        %v329 = vadd.f32 0.0, %v328
        %v330 = vpop.f32.mrf.mxu0
        %v331 = vadd.f32 0.0, %v330
        %332 = vdwg.mxu0
        %v333 = vadd.f32 %v298, %v329
        %v334 = vadd.f32 %v299, %v331
        %335 = vst [vmem:[%s287] sm:$0xff] %v333
        %336 = vst [vmem:[%s287 + $0x8] sm:$0xff] %v334
        %p337 = scmp.eq.s32.totalorder %s19, 2
        // Predicated region
        $region78: #{rgcn_forward.5} parent=68 // pred_check
          %p338 = pneg %p337
        $region79: #{rgcn_forward.5} parent=68 // pred_check_branch
          %340 = sbr.rel (%p338) target = $region81
        $region80: #{rgcn_forward.5} parent=68 // pred_region
          %v341 = vld [vmem:[%s287] sm:$0xff]
          %v342 = vld [vmem:[%s287 + $0x8] sm:$0xff]
          %v343 = vmax.f32 %v341, 0.0
          %v344 = vmax.f32 %v342, 0.0
          %345 = vst [vmem:[%s287] sm:$0xff] %v343
          %346 = vst [vmem:[%s287 + $0x8] sm:$0xff] %v344
        $region81: #{rgcn_forward.5} parent=68 // pred_fallthru
          _
        %s347 = smul.u32 2, %s18
        %p348 = scmp.lt.s32.totalorder %s347, 1
        %s349 = scalar_select %p348, %s347, 1
        %s350 = smul.addr %s349, 8
        %s351 = scalar_lea.vmem %s3, %s350
        // Predicated region
        $region82: #{rgcn_forward.5} parent=68 // pred_check
          %p352 = pneg %p124
        $region83: #{rgcn_forward.5} parent=68 // pred_check_branch
          %354 = sbr.rel (%p352) target = $region85
        $region84: #{rgcn_forward.5} parent=68 // pred_region
          %s355 = smul.u32 2, %s18
        $region85: #{rgcn_forward.5} parent=68 // pred_fallthru
          _
        // Predicated region
        $region86: #{rgcn_forward.5} parent=68 // pred_check
          %p356 = pneg %p124
        $region87: #{rgcn_forward.5} parent=68 // pred_check_branch
          %358 = sbr.rel (%p356) target = $region89
        $region88: #{rgcn_forward.5} parent=68 // pred_region
          %s359 = smul.u32 2, %s18
          %p360 = scmp.lt.s32.totalorder %s359, 1
          %s361 = scalar_select %p360, %s359, 1
          %s362 = smul.addr %s361, 8
          %s363 = scalar_lea.vmem %s3, %s362
        $region89: #{rgcn_forward.5} parent=68 // pred_fallthru
          _
      $region69: #{rgcn_forward.5} parent=5 // pred_fallthru
        _
      %p364 = scmp.le.s32.totalorder 2, %s9
      // Predicated region
      $region90: #{rgcn_forward.5} parent=5 // pred_check
        %p365 = pneg %p364
      $region91: #{rgcn_forward.5} parent=5 // pred_check_branch
        %367 = sbr.rel (%p365) target = $region93
      $region92: #{rgcn_forward.5} parent=5 // pred_region
        %s368 = ssub.s32 %s9, 2
      $region93: #{rgcn_forward.5} parent=5 // pred_fallthru
        _
    $region6: #{rgcn_forward.5} parent=1 // loop_footer
      %s13 = sadd.s32 1, %s9
    $region7: #{rgcn_forward.5} parent=1 // loop_footer_branch
      %8 = sbr.rel target = $region3
    $region8: #{rgcn_forward.5} parent=1 // loop_exit
      _

// kernel: rgcn_forward.6
$region0: #{rgcn_forward.6}
  #allocation0 [shape = 'u32[]', space=smem, size = 0x4, offset = 0x4, fixed_abs, tag = 'smem constant byte address 0x4 - core index']
  #allocation1 [shape = 'u32[72,128]{1,0:T(1,128)}', space=vmem, size = 0x9000, scoped, tag = 'internal scratch']
  %s0 = inlined_call_operand.vmem [shape: f32[16,128], index: 0, kind: input, shape index: {}]
  %s1 = inlined_call_operand.vmem [shape: f32[128,512], index: 1, kind: input, shape index: {}]
  %s2 = inlined_call_operand.vmem [shape: f32[1,128], index: 2, kind: input, shape index: {}]
  %s3 = inlined_call_operand.vmem [shape: f32[16,128], index: 3, kind: output, shape index: {0}]
  %s4 = inlined_call_operand.vmem [shape: bf16[16,384], index: 4, kind: output, shape index: {1}]
  %5 = xla_tuple %s3, %s4
  %s6 = sld [smem:[#allocation0]]
  $region30: #{rgcn_forward.6} parent=0
    _
  %s8 = ssub.s32 1, %s6
  %s9 = scalar_select 0, %s8, %s6
  // Predicated region
  $region2: #{rgcn_forward.6} parent=0 // pred_check
    _
  $region3: #{rgcn_forward.6} parent=0 // pred_check_branch
    %11 = sbr.rel (0) target = $region5
  $region4: #{rgcn_forward.6} parent=0 // pred_region
    _
  $region5: #{rgcn_forward.6} parent=0 // pred_fallthru
    _
  // Predicated region
  $region6: #{rgcn_forward.6} parent=0 // pred_check
    _
  $region7: #{rgcn_forward.6} parent=0 // pred_check_branch
    %13 = sbr.rel (0) target = $region9
  $region8: #{rgcn_forward.6} parent=0 // pred_region
    _
  $region9: #{rgcn_forward.6} parent=0 // pred_fallthru
    _
  // Predicated region
  $region10: #{rgcn_forward.6} parent=0 // pred_check
    _
  $region11: #{rgcn_forward.6} parent=0 // pred_check_branch
    %15 = sbr.rel (0) target = $region13
  $region12: #{rgcn_forward.6} parent=0 // pred_region
    _
  $region13: #{rgcn_forward.6} parent=0 // pred_fallthru
    _
  %v16 = vld [vmem:[%s0] sm:$0xff]
  %v17 = vld [vmem:[%s0 + $0x8] sm:$0xff]
  %v18 = vld [vmem:[%s1] sm:$0xff]
  %v19 = vld [vmem:[%s1 + $0x8] sm:$0xff]
  %v20 = vld [vmem:[%s1 + $0x10] sm:$0xff]
  %v21 = vld [vmem:[%s1 + $0x18] sm:$0xff]
  %v22 = vld [vmem:[%s1 + $0x20] sm:$0xff]
  %v23 = vld [vmem:[%s1 + $0x28] sm:$0xff]
  %v24 = vld [vmem:[%s1 + $0x30] sm:$0xff]
  %v25 = vld [vmem:[%s1 + $0x38] sm:$0xff]
  %v26 = vld [vmem:[%s1 + $0x40] sm:$0xff]
  %v27 = vld [vmem:[%s1 + $0x48] sm:$0xff]
  %v28 = vld [vmem:[%s1 + $0x50] sm:$0xff]
  %v29 = vld [vmem:[%s1 + $0x58] sm:$0xff]
  %v30 = vld [vmem:[%s1 + $0x60] sm:$0xff]
  %v31 = vld [vmem:[%s1 + $0x68] sm:$0xff]
  %v32 = vld [vmem:[%s1 + $0x70] sm:$0xff]
  %v33 = vld [vmem:[%s1 + $0x78] sm:$0xff]
  %v34 = vld [vmem:[%s1 + $0x80] sm:$0xff]
  %v35 = vld [vmem:[%s1 + $0x88] sm:$0xff]
  %v36 = vld [vmem:[%s1 + $0x90] sm:$0xff]
  %v37 = vld [vmem:[%s1 + $0x98] sm:$0xff]
  %v38 = vld [vmem:[%s1 + $0xa0] sm:$0xff]
  %v39 = vld [vmem:[%s1 + $0xa8] sm:$0xff]
  %v40 = vld [vmem:[%s1 + $0xb0] sm:$0xff]
  %v41 = vld [vmem:[%s1 + $0xb8] sm:$0xff]
  %v42 = vld [vmem:[%s1 + $0xc0] sm:$0xff]
  %v43 = vld [vmem:[%s1 + $0xc8] sm:$0xff]
  %v44 = vld [vmem:[%s1 + $0xd0] sm:$0xff]
  %v45 = vld [vmem:[%s1 + $0xd8] sm:$0xff]
  %v46 = vld [vmem:[%s1 + $0xe0] sm:$0xff]
  %v47 = vld [vmem:[%s1 + $0xe8] sm:$0xff]
  %v48 = vld [vmem:[%s1 + $0xf0] sm:$0xff]
  %v49 = vld [vmem:[%s1 + $0xf8] sm:$0xff]
  %v50 = vld [vmem:[%s1 + $0x100] sm:$0xff]
  %v51 = vld [vmem:[%s1 + $0x108] sm:$0xff]
  %v52 = vld [vmem:[%s1 + $0x110] sm:$0xff]
  %v53 = vld [vmem:[%s1 + $0x118] sm:$0xff]
  %v54 = vld [vmem:[%s1 + $0x120] sm:$0xff]
  %v55 = vld [vmem:[%s1 + $0x128] sm:$0xff]
  %v56 = vld [vmem:[%s1 + $0x130] sm:$0xff]
  %v57 = vld [vmem:[%s1 + $0x138] sm:$0xff]
  %v58 = vld [vmem:[%s1 + $0x140] sm:$0xff]
  %v59 = vld [vmem:[%s1 + $0x148] sm:$0xff]
  %v60 = vld [vmem:[%s1 + $0x150] sm:$0xff]
  %v61 = vld [vmem:[%s1 + $0x158] sm:$0xff]
  %v62 = vld [vmem:[%s1 + $0x160] sm:$0xff]
  %v63 = vld [vmem:[%s1 + $0x168] sm:$0xff]
  %v64 = vld [vmem:[%s1 + $0x170] sm:$0xff]
  %v65 = vld [vmem:[%s1 + $0x178] sm:$0xff]
  %v66 = vld [vmem:[%s1 + $0x180] sm:$0xff]
  %v67 = vld [vmem:[%s1 + $0x188] sm:$0xff]
  %v68 = vld [vmem:[%s1 + $0x190] sm:$0xff]
  %v69 = vld [vmem:[%s1 + $0x198] sm:$0xff]
  %v70 = vld [vmem:[%s1 + $0x1a0] sm:$0xff]
  %v71 = vld [vmem:[%s1 + $0x1a8] sm:$0xff]
  %v72 = vld [vmem:[%s1 + $0x1b0] sm:$0xff]
  %v73 = vld [vmem:[%s1 + $0x1b8] sm:$0xff]
  %v74 = vld [vmem:[%s1 + $0x1c0] sm:$0xff]
  %v75 = vld [vmem:[%s1 + $0x1c8] sm:$0xff]
  %v76 = vld [vmem:[%s1 + $0x1d0] sm:$0xff]
  %v77 = vld [vmem:[%s1 + $0x1d8] sm:$0xff]
  %v78 = vld [vmem:[%s1 + $0x1e0] sm:$0xff]
  %v79 = vld [vmem:[%s1 + $0x1e8] sm:$0xff]
  %v80 = vld [vmem:[%s1 + $0x1f0] sm:$0xff]
  %v81 = vld [vmem:[%s1 + $0x1f8] sm:$0xff]
  %82 = vmatpush.msra.mxu0 %v78
  %83 = vmatpush.msra.mxu0 %v74
  %84 = vmatpush.msra.mxu0 %v70
  %85 = vmatpush.msra.mxu0 %v66
  %86 = vmatpush.msra.mxu0 %v62
  %87 = vmatpush.msra.mxu0 %v58
  %88 = vmatpush.msra.mxu0 %v54
  %89 = vmatpush.msra.mxu0 %v50
  %90 = vmatpush.msra.mxu0 %v46
  %91 = vmatpush.msra.mxu0 %v42
  %92 = vmatpush.msra.mxu0 %v38
  %93 = vmatpush.msra.mxu0 %v34
  %94 = vmatpush.msra.mxu0 %v30
  %95 = vmatpush.msra.mxu0 %v26
  %96 = vmatpush.msra.mxu0 %v22
  %97 = vmatpush.msra.mxu0 %v18
  %98 = vmatmul.f32.gmra.mxu0 %v16
  %v99 = vpop.f32.mrf.mxu0
  %v100 = vadd.f32 0.0, %v99
  %101 = vmatmul.f32.gmra.mxu0 %v17
  %v102 = vpop.f32.mrf.mxu0
  %v103 = vadd.f32 0.0, %v102
  %104 = vdwg.mxu0
  %105 = vmatpush.msra.mxu0 %v79
  %106 = vmatpush.msra.mxu0 %v75
  %107 = vmatpush.msra.mxu0 %v71
  %108 = vmatpush.msra.mxu0 %v67
  %109 = vmatpush.msra.mxu0 %v63
  %110 = vmatpush.msra.mxu0 %v59
  %111 = vmatpush.msra.mxu0 %v55
  %112 = vmatpush.msra.mxu0 %v51
  %113 = vmatpush.msra.mxu0 %v47
  %114 = vmatpush.msra.mxu0 %v43
  %115 = vmatpush.msra.mxu0 %v39
  %116 = vmatpush.msra.mxu0 %v35
  %117 = vmatpush.msra.mxu0 %v31
  %118 = vmatpush.msra.mxu0 %v27
  %119 = vmatpush.msra.mxu0 %v23
  %120 = vmatpush.msra.mxu0 %v19
  %121 = vmatmul.f32.gmra.mxu0 %v16
  %v122 = vpop.f32.mrf.mxu0
  %v123 = vadd.f32 0.0, %v122
  %124 = vmatmul.f32.gmra.mxu0 %v17
  %v125 = vpop.f32.mrf.mxu0
  %v126 = vadd.f32 0.0, %v125
  %127 = vdwg.mxu0
  %128 = vmatpush.msra.mxu0 %v80
  %129 = vmatpush.msra.mxu0 %v76
  %130 = vmatpush.msra.mxu0 %v72
  %131 = vmatpush.msra.mxu0 %v68
  %132 = vmatpush.msra.mxu0 %v64
  %133 = vmatpush.msra.mxu0 %v60
  %134 = vmatpush.msra.mxu0 %v56
  %135 = vmatpush.msra.mxu0 %v52
  %136 = vmatpush.msra.mxu0 %v48
  %137 = vmatpush.msra.mxu0 %v44
  %138 = vmatpush.msra.mxu0 %v40
  %139 = vmatpush.msra.mxu0 %v36
  %140 = vmatpush.msra.mxu0 %v32
  %141 = vmatpush.msra.mxu0 %v28
  %142 = vmatpush.msra.mxu0 %v24
  %143 = vmatpush.msra.mxu0 %v20
  %144 = vmatmul.f32.gmra.mxu0 %v16
  %v145 = vpop.f32.mrf.mxu0
  %v146 = vadd.f32 0.0, %v145
  %147 = vmatmul.f32.gmra.mxu0 %v17
  %v148 = vpop.f32.mrf.mxu0
  %v149 = vadd.f32 0.0, %v148
  %150 = vdwg.mxu0
  %151 = vmatpush.msra.mxu0 %v81
  %152 = vmatpush.msra.mxu0 %v77
  %153 = vmatpush.msra.mxu0 %v73
  %154 = vmatpush.msra.mxu0 %v69
  %155 = vmatpush.msra.mxu0 %v65
  %156 = vmatpush.msra.mxu0 %v61
  %157 = vmatpush.msra.mxu0 %v57
  %158 = vmatpush.msra.mxu0 %v53
  %159 = vmatpush.msra.mxu0 %v49
  %160 = vmatpush.msra.mxu0 %v45
  %161 = vmatpush.msra.mxu0 %v41
  %162 = vmatpush.msra.mxu0 %v37
  %163 = vmatpush.msra.mxu0 %v33
  %164 = vmatpush.msra.mxu0 %v29
  %165 = vmatpush.msra.mxu0 %v25
  %166 = vmatpush.msra.mxu0 %v21
  %167 = vmatmul.f32.gmra.mxu0 %v16
  %v168 = vpop.f32.mrf.mxu0
  %v169 = vadd.f32 0.0, %v168
  %170 = vmatmul.f32.gmra.mxu0 %v17
  %v171 = vpop.f32.mrf.mxu0
  %v172 = vadd.f32 0.0, %v171
  %173 = vdwg.mxu0
  %v174 = vld [vmem:[%s2] sm:$0x1]
  %v176 = vperm.slane %v174, 0
  %v178 = vadd.f32 %v100, %v176
  %v179 = vadd.f32 %v103, %v176
  %180 = vst [vmem:[%s3] sm:$0xff] %v178
  %181 = vst [vmem:[%s3 + $0x8] sm:$0xff] %v179
  %v182 = vpack.c.bf16 %v146, %v123
  %v183 = vpack.c.bf16 %v169, %v169
  %v184 = vpack.c.bf16 %v149, %v126
  %v185 = vpack.c.bf16 %v172, %v172
  %186 = vst [vmem:[%s4] sm:$0xff] %v182
  %187 = vst [vmem:[%s4 + $0x8] sm:$0xf] %v183
  %188 = vst [vmem:[%s4 + $0xc] sm:$0xff] %v184
  %189 = vst [vmem:[%s4 + $0x14] sm:$0xf] %v185
  // Predicated region
  $region14: #{rgcn_forward.6} parent=0 // pred_check
    _
  $region15: #{rgcn_forward.6} parent=0 // pred_check_branch
    %191 = sbr.rel (0) target = $region17
  $region16: #{rgcn_forward.6} parent=0 // pred_region
    _
  $region17: #{rgcn_forward.6} parent=0 // pred_fallthru
    _
  // Predicated region
  $region18: #{rgcn_forward.6} parent=0 // pred_check
    _
  $region19: #{rgcn_forward.6} parent=0 // pred_check_branch
    %193 = sbr.rel (0) target = $region21
  $region20: #{rgcn_forward.6} parent=0 // pred_region
    _
  $region21: #{rgcn_forward.6} parent=0 // pred_fallthru
    _
  // Predicated region
  $region22: #{rgcn_forward.6} parent=0 // pred_check
    _
  $region23: #{rgcn_forward.6} parent=0 // pred_check_branch
    %195 = sbr.rel (0) target = $region25
  $region24: #{rgcn_forward.6} parent=0 // pred_region
    _
  $region25: #{rgcn_forward.6} parent=0 // pred_fallthru
    _
  // Predicated region
  $region26: #{rgcn_forward.6} parent=0 // pred_check
    _
  $region27: #{rgcn_forward.6} parent=0 // pred_check_branch
    %197 = sbr.rel (0) target = $region29
  $region28: #{rgcn_forward.6} parent=0 // pred_region
    _
  $region29: #{rgcn_forward.6} parent=0 // pred_fallthru
    _

// kernel: rgcn_forward.7
$region0: #{rgcn_forward.7}
  #allocation0 [shape = 'u32[]', space=smem, size = 0x4, offset = 0x4, fixed_abs, tag = 'smem constant byte address 0x4 - core index']
  #allocation1 [shape = 'u32[72,128]{1,0:T(1,128)}', space=vmem, size = 0x9000, scoped, tag = 'internal scratch']
  %s0 = inlined_call_operand.vmem [shape: bf16[3,16,16], index: 0, kind: input, shape index: {}]
  %s1 = inlined_call_operand.vmem [shape: f32[16,128], index: 1, kind: input, shape index: {}]
  %s2 = inlined_call_operand.vmem [shape: bf16[16,384], index: 2, kind: input, shape index: {}]
  %s3 = inlined_call_operand.vmem [shape: f32[128,128], index: 3, kind: input, shape index: {}]
  %s4 = inlined_call_operand.vmem [shape: f32[1,128], index: 4, kind: input, shape index: {}]
  %s5 = inlined_call_operand.hbm [shape: f32[16,128], index: 5, kind: output, shape index: {0}]
  %s6 = inlined_call_operand.vmem [shape: f32[16,128], index: 6, kind: output, shape index: {1}]
  %7 = xla_tuple %s5, %s6
  %s8 = sld [smem:[#allocation0]]
  $region110: #{rgcn_forward.7} parent=0
    _
  %s10 = ssub.s32 1, %s8
  %s11 = scalar_select 0, %s10, %s8
  $region1: #{rgcn_forward.7} parent=0
    #allocation2 [shape = 'u8[8192]{0}', space=vmem, size = 0x2000, scoped, tag = 'input window, operand 2']
    #allocation3 [shape = 'u8[8192]{0}', space=vmem, size = 0x2000, scoped, tag = 'output window, operand 0, single buffered']
    #allocation4 [shape = 's32[2]{0}', space=sflag, size = 0x8, scoped, tag = 'scoped memory for rgcn_forward.7']
    %12 = vsyncpa [#allocation4], 0
    loop: start=0, step=1, limit=5
    $region2: #{rgcn_forward.7} parent=1 // loop_pre_header
      _
    $region3: #{rgcn_forward.7} parent=1 // loop_header
      %s14 = sphi 0, %s18
      %p15 = scmp.ge.s32.totalorder %s14, 5
      %s21 = sphi 0, %s33
      %s22 = sphi 0, %s29
      %s23 = sphi 0, %s21
      %s24 = sphi 0, %s22
      %s25 = sphi 0, %s23
      %s26 = sphi 0, %s24
      %s38 = sphi 0, %s40
      %s41 = sphi 0, %s38
      %s42 = sphi 0, %s41
      %s58 = sphi 0, %s42
      %s64 = sphi 0, %s66
      %s67 = sphi 0, %s64
      %s68 = sphi 0, %s67
      %s84 = sphi 0, %s68
      %s90 = sphi 0, %s92
      %s93 = sphi 0, %s90
      %s94 = sphi 0, %s93
      %s110 = sphi 0, %s94
      %s114 = sphi 0, %s114
      %s116 = sphi 0, %s114
      %s117 = sphi 0, %s116
      %s131 = sphi 0, %s117
      %s135 = sphi 0, %s135
      %s137 = sphi 0, %s135
      %s138 = sphi 0, %s137
      %s152 = sphi 0, %s138
      %s158 = sphi 0, %s160
      %s161 = sphi 0, %s158
      %s162 = sphi 0, %s161
      %s178 = sphi 0, %s162
      %s184 = sphi 0, %s186
      %s187 = sphi 0, %s184
      %s188 = sphi 0, %s187
      %s204 = sphi 0, %s188
    $region4: #{rgcn_forward.7} parent=1 // loop_header_branch
      %17 = sbr.rel (%p15) target = $region8
    $region5: #{rgcn_forward.7} parent=1 // loop_body
      %s19 = ssub.s32 %s14, 1
      %s20 = ssub.s32 %s14, 2
      %s27 = sadd.s32 1, %s22
      %p28 = scmp.ge.s32.totalorder %s27, 3
      %s29 = scalar_select %p28, 0, %s27
      %s30 = sadd.s32 1, %s21
      %s31 = scalar_select %p28, %s30, %s21
      %p32 = scmp.ge.s32.totalorder %s31, 1
      %s33 = scalar_select %p32, 0, %s31
      %s34 = ssub.s32 %s22, %s29
      %s35 = ssub.s32 %s21, %s33
      %s36 = sor.u32 %s34, %s35
      %p37 = scmp.eq.s32.totalorder %s36, 0
      %s39 = sadd.s32 %s38, 1
      %s40 = scalar_select %p37, %s38, %s39
      %p43 = pneg %p37
      %p44 = scmp.eq.s32.totalorder %s14, 2
      %p45 = por %p43, %p44
      %p46 = scmp.ne.s32.totalorder %s38, %s41
      %p47 = scmp.eq.s32.totalorder %s14, 0
      %p48 = por %p46, %p47
      %p49 = scmp.ne.s32.totalorder %s38, %s41
      %p50 = scmp.eq.s32.totalorder %s19, 2
      %p51 = por %p49, %p50
      %p52 = scmp.ne.s32.totalorder %s41, %s42
      %p53 = scmp.eq.s32.totalorder %s19, 0
      %p54 = por %p52, %p53
      %p55 = scmp.ne.s32.totalorder %s41, %s42
      %p56 = scmp.eq.s32.totalorder %s20, 2
      %p57 = por %p55, %p56
      %p59 = scmp.ne.s32.totalorder %s42, %s58
      %p60 = scmp.eq.s32.totalorder %s20, 0
      %p61 = por %p59, %p60
      %s62 = ssub.s32 %s21, %s33
      %p63 = scmp.eq.s32.totalorder %s62, 0
      %s65 = sadd.s32 %s64, 1
      %s66 = scalar_select %p63, %s64, %s65
      %p69 = pneg %p63
      %p70 = scmp.eq.s32.totalorder %s14, 2
      %p71 = por %p69, %p70
      %p72 = scmp.ne.s32.totalorder %s64, %s67
      %p73 = scmp.eq.s32.totalorder %s14, 0
      %p74 = por %p72, %p73
      %p75 = scmp.ne.s32.totalorder %s64, %s67
      %p76 = scmp.eq.s32.totalorder %s19, 2
      %p77 = por %p75, %p76
      %p78 = scmp.ne.s32.totalorder %s67, %s68
      %p79 = scmp.eq.s32.totalorder %s19, 0
      %p80 = por %p78, %p79
      %p81 = scmp.ne.s32.totalorder %s67, %s68
      %p82 = scmp.eq.s32.totalorder %s20, 2
      %p83 = por %p81, %p82
      %p85 = scmp.ne.s32.totalorder %s68, %s84
      %p86 = scmp.eq.s32.totalorder %s20, 0
      %p87 = por %p85, %p86
      %s88 = ssub.s32 %s22, %s29
      %p89 = scmp.eq.s32.totalorder %s88, 0
      %s91 = sadd.s32 %s90, 1
      %s92 = scalar_select %p89, %s90, %s91
      %p95 = pneg %p89
      %p96 = scmp.eq.s32.totalorder %s14, 2
      %p97 = por %p95, %p96
      %p98 = scmp.ne.s32.totalorder %s90, %s93
      %p99 = scmp.eq.s32.totalorder %s14, 0
      %p100 = por %p98, %p99
      %p101 = scmp.ne.s32.totalorder %s90, %s93
      %p102 = scmp.eq.s32.totalorder %s19, 2
      %p103 = por %p101, %p102
      %p104 = scmp.ne.s32.totalorder %s93, %s94
      %p105 = scmp.eq.s32.totalorder %s19, 0
      %p106 = por %p104, %p105
      %p107 = scmp.ne.s32.totalorder %s93, %s94
      %p108 = scmp.eq.s32.totalorder %s20, 2
      %p109 = por %p107, %p108
      %p111 = scmp.ne.s32.totalorder %s94, %s110
      %p112 = scmp.eq.s32.totalorder %s20, 0
      %p113 = por %p111, %p112
      %s115 = sadd.s32 %s114, 1
      %p118 = scmp.eq.s32.totalorder %s14, 2
      %p119 = scmp.ne.s32.totalorder %s114, %s116
      %p120 = scmp.eq.s32.totalorder %s14, 0
      %p121 = por %p119, %p120
      %p122 = scmp.ne.s32.totalorder %s114, %s116
      %p123 = scmp.eq.s32.totalorder %s19, 2
      %p124 = por %p122, %p123
      %p125 = scmp.ne.s32.totalorder %s116, %s117
      %p126 = scmp.eq.s32.totalorder %s19, 0
      %p127 = por %p125, %p126
      %p128 = scmp.ne.s32.totalorder %s116, %s117
      %p129 = scmp.eq.s32.totalorder %s20, 2
      %p130 = por %p128, %p129
      %p132 = scmp.ne.s32.totalorder %s117, %s131
      %p133 = scmp.eq.s32.totalorder %s20, 0
      %p134 = por %p132, %p133
      %s136 = sadd.s32 %s135, 1
      %p139 = scmp.eq.s32.totalorder %s14, 2
      %p140 = scmp.ne.s32.totalorder %s135, %s137
      %p141 = scmp.eq.s32.totalorder %s14, 0
      %p142 = por %p140, %p141
      %p143 = scmp.ne.s32.totalorder %s135, %s137
      %p144 = scmp.eq.s32.totalorder %s19, 2
      %p145 = por %p143, %p144
      %p146 = scmp.ne.s32.totalorder %s137, %s138
      %p147 = scmp.eq.s32.totalorder %s19, 0
      %p148 = por %p146, %p147
      %p149 = scmp.ne.s32.totalorder %s137, %s138
      %p150 = scmp.eq.s32.totalorder %s20, 2
      %p151 = por %p149, %p150
      %p153 = scmp.ne.s32.totalorder %s138, %s152
      %p154 = scmp.eq.s32.totalorder %s20, 0
      %p155 = por %p153, %p154
      %s156 = ssub.s32 %s21, %s33
      %p157 = scmp.eq.s32.totalorder %s156, 0
      %s159 = sadd.s32 %s158, 1
      %s160 = scalar_select %p157, %s158, %s159
      %p163 = pneg %p157
      %p164 = scmp.eq.s32.totalorder %s14, 2
      %p165 = por %p163, %p164
      %p166 = scmp.ne.s32.totalorder %s158, %s161
      %p167 = scmp.eq.s32.totalorder %s14, 0
      %p168 = por %p166, %p167
      %p169 = scmp.ne.s32.totalorder %s158, %s161
      %p170 = scmp.eq.s32.totalorder %s19, 2
      %p171 = por %p169, %p170
      %p172 = scmp.ne.s32.totalorder %s161, %s162
      %p173 = scmp.eq.s32.totalorder %s19, 0
      %p174 = por %p172, %p173
      %p175 = scmp.ne.s32.totalorder %s161, %s162
      %p176 = scmp.eq.s32.totalorder %s20, 2
      %p177 = por %p175, %p176
      %p179 = scmp.ne.s32.totalorder %s162, %s178
      %p180 = scmp.eq.s32.totalorder %s20, 0
      %p181 = por %p179, %p180
      %s182 = ssub.s32 %s21, %s33
      %p183 = scmp.eq.s32.totalorder %s182, 0
      %s185 = sadd.s32 %s184, 1
      %s186 = scalar_select %p183, %s184, %s185
      %p189 = pneg %p183
      %p190 = scmp.eq.s32.totalorder %s14, 2
      %p191 = por %p189, %p190
      %p192 = scmp.ne.s32.totalorder %s184, %s187
      %p193 = scmp.eq.s32.totalorder %s14, 0
      %p194 = por %p192, %p193
      %p195 = scmp.ne.s32.totalorder %s184, %s187
      %p196 = scmp.eq.s32.totalorder %s19, 2
      %p197 = por %p195, %p196
      %p198 = scmp.ne.s32.totalorder %s187, %s188
      %p199 = scmp.eq.s32.totalorder %s19, 0
      %p200 = por %p198, %p199
      %p201 = scmp.ne.s32.totalorder %s187, %s188
      %p202 = scmp.eq.s32.totalorder %s20, 2
      %p203 = por %p201, %p202
      %p205 = scmp.ne.s32.totalorder %s188, %s204
      %p206 = scmp.eq.s32.totalorder %s20, 0
      %p207 = por %p205, %p206
      %p208 = scmp.le.s32.totalorder 1, %s14
      %p209 = scmp.lt.s32.totalorder %s14, 4
      %p210 = pnand %p208, %p209
      %p211 = pneg %p210
      // Predicated region
      $region9: #{rgcn_forward.7} parent=5 // pred_check
        _
      $region10: #{rgcn_forward.7} parent=5 // pred_check_branch
        %213 = sbr.rel (%p210) target = $region12
      $region11: #{rgcn_forward.7} parent=5 // pred_region
        %s214 = ssub.s32 %s14, 1
        // Predicated region
        $region13: #{rgcn_forward.7} parent=11 // pred_check
          %p215 = pneg %p80
        $region14: #{rgcn_forward.7} parent=11 // pred_check_branch
          %217 = sbr.rel (%p215) target = $region16
        $region15: #{rgcn_forward.7} parent=11 // pred_region
          %s218 = smul.u32 2, %s23
          %p219 = scmp.lt.s32.totalorder %s218, 1
          %s220 = scalar_select %p219, %s218, 1
          %s221 = smul.addr %s220, 8
          %s222 = scalar_lea.vmem %s1, %s221
          %s223 = smul.u32 2, %s23
        $region16: #{rgcn_forward.7} parent=11 // pred_fallthru
          _
        // Predicated region
        $region17: #{rgcn_forward.7} parent=11 // pred_check
          %p224 = pneg %p127
        $region18: #{rgcn_forward.7} parent=11 // pred_check_branch
          %226 = sbr.rel (%p224) target = $region20
        $region19: #{rgcn_forward.7} parent=11 // pred_region
          _
        $region20: #{rgcn_forward.7} parent=11 // pred_fallthru
          _
        // Predicated region
        $region21: #{rgcn_forward.7} parent=11 // pred_check
          %p227 = pneg %p148
        $region22: #{rgcn_forward.7} parent=11 // pred_check_branch
          %229 = sbr.rel (%p227) target = $region24
        $region23: #{rgcn_forward.7} parent=11 // pred_region
          _
        $region24: #{rgcn_forward.7} parent=11 // pred_fallthru
          _
      $region12: #{rgcn_forward.7} parent=5 // pred_fallthru
        _
      %p230 = scmp.lt.s32.totalorder %s14, 3
      // Predicated region
      $region25: #{rgcn_forward.7} parent=5 // pred_check
        %p231 = pneg %p230
      $region26: #{rgcn_forward.7} parent=5 // pred_check_branch
        %233 = sbr.rel (%p231) target = $region28
      $region27: #{rgcn_forward.7} parent=5 // pred_region
        // Predicated region
        $region29: #{rgcn_forward.7} parent=27 // pred_check
          %p234 = pneg %p48
        $region30: #{rgcn_forward.7} parent=27 // pred_check_branch
          %236 = sbr.rel (%p234) target = $region32
        $region31: #{rgcn_forward.7} parent=27 // pred_region
          %s237 = smul.u32 2, %s21
          %p238 = scmp.lt.s32.totalorder %s22, 2
          %s239 = scalar_select %p238, %s22, 2
          %p240 = scmp.lt.s32.totalorder %s237, 1
          %s241 = scalar_select %p240, %s237, 1
          %s242 = smul.addr %s239, 2
          %s243 = sadd.s32 %s241, %s242
          %s244 = smul.addr %s243, 4
          %s245 = scalar_lea.vmem %s0, %s244
          %s246 = smul.u32 2, %s21
        $region32: #{rgcn_forward.7} parent=27 // pred_fallthru
          _
        // Predicated region
        $region33: #{rgcn_forward.7} parent=27 // pred_check
          %p247 = pneg %p100
        $region34: #{rgcn_forward.7} parent=27 // pred_check_branch
          %249 = sbr.rel (%p247) target = $region36
        $region35: #{rgcn_forward.7} parent=27 // pred_region
          %s250 = sand.u32 %s90, 1
          %s251 = sand.u32 %s90, 1
          %s252 = smul.addr %s251, 8
          %s253 = scalar_lea.vmem [#allocation2], %s252
          %s254 = smul.addr %s22, 4
          %s255 = scalar_lea.vmem %s2, %s254
          // Predicated region
          $region37: #{rgcn_forward.7} parent=35 // pred_check
            _
          $region38: #{rgcn_forward.7} parent=35 // pred_check_branch
            %257 = sbr.rel (0) target = $region40
          $region39: #{rgcn_forward.7} parent=35 // pred_region
            // Predicated region
            $region41: #{rgcn_forward.7} parent=39 // pred_check
              _
            $region42: #{rgcn_forward.7} parent=39 // pred_check_branch
              %259 = sbr.rel target = $region44
            $region43: #{rgcn_forward.7} parent=39 // pred_region
              // Predicated region
              $region56: #{rgcn_forward.7} parent=43 // pred_check
                _
              $region57: #{rgcn_forward.7} parent=43 // pred_check_branch
                %277 = sbr.rel (0) target = $region59
              $region58: #{rgcn_forward.7} parent=43 // pred_region
                loop: start=0, step=1, limit=1
                $region60: #{rgcn_forward.7} parent=58 // loop_pre_header
                  _
                $region61: #{rgcn_forward.7} parent=58 // loop_header
                  %s279 = sphi 0, %s283
                  %p280 = scmp.ge.s32.totalorder %s279, 1
                  %s284 = sphi %s255, %s255
                  %s285 = sphi %s253, %s253
                $region62: #{rgcn_forward.7} parent=58 // loop_header_branch
                  %282 = sbr.rel (%p280) target = $region66
                $region63: #{rgcn_forward.7} parent=58 // loop_body
                  _
                $region64: #{rgcn_forward.7} parent=58 // loop_footer
                  %s283 = sadd.s32 1, %s279
                $region65: #{rgcn_forward.7} parent=58 // loop_footer_branch
                  %278 = sbr.rel target = $region61
                $region66: #{rgcn_forward.7} parent=58 // loop_exit
                  _
                %s287 = ssub.s32 16, 1
                loop: start=0, step=1, limit=1
                $region67: #{rgcn_forward.7} parent=58 // loop_pre_header
                  _
                $region68: #{rgcn_forward.7} parent=58 // loop_header
                  %s289 = sphi 0, %s293
                  %p290 = scmp.ge.s32.totalorder %s289, 1
                  %s294 = sphi %s255, %s255
                  %s295 = sphi %s253, %s253
                $region69: #{rgcn_forward.7} parent=58 // loop_header_branch
                  %292 = sbr.rel (%p290) target = $region73
                $region70: #{rgcn_forward.7} parent=58 // loop_body
                  %v296 = vld [vmem:[%s294] sm:%s287]
                  %297 = vst [vmem:[%s295] sm:%s287] %v296
                  %v298 = vld [vmem:[%s294 + $0xc] sm:%s287]
                  %299 = vst [vmem:[%s295 + $0x4] sm:%s287] %v298
                $region71: #{rgcn_forward.7} parent=58 // loop_footer
                  %s293 = sadd.s32 1, %s289
                $region72: #{rgcn_forward.7} parent=58 // loop_footer_branch
                  %288 = sbr.rel target = $region68
                $region73: #{rgcn_forward.7} parent=58 // loop_exit
                  _
              $region59: #{rgcn_forward.7} parent=43 // pred_fallthru
                _
            $region44: #{rgcn_forward.7} parent=39 // pred_fallthru
              _
            // Predicated region
            $region45: #{rgcn_forward.7} parent=39 // pred_check
              _
            $region46: #{rgcn_forward.7} parent=39 // pred_check_branch
              %261 = sbr.rel (0) target = $region48
            $region47: #{rgcn_forward.7} parent=39 // pred_region
              %s263 = ssub.s32 16, 1
              loop: start=0, step=1, limit=1
              $region49: #{rgcn_forward.7} parent=47 // loop_pre_header
                _
              $region50: #{rgcn_forward.7} parent=47 // loop_header
                %s265 = sphi 0, %s269
                %p266 = scmp.ge.s32.totalorder %s265, 1
                %s270 = sphi %s255, %s255
                %s271 = sphi %s253, %s253
              $region51: #{rgcn_forward.7} parent=47 // loop_header_branch
                %268 = sbr.rel (%p266) target = $region55
              $region52: #{rgcn_forward.7} parent=47 // loop_body
                %v272 = vld [vmem:[%s270] sm:%s263]
                %273 = vst [vmem:[%s271] sm:%s263] %v272
                %v274 = vld [vmem:[%s270 + $0xc] sm:%s263]
                %275 = vst [vmem:[%s271 + $0x4] sm:%s263] %v274
              $region53: #{rgcn_forward.7} parent=47 // loop_footer
                %s269 = sadd.s32 1, %s265
              $region54: #{rgcn_forward.7} parent=47 // loop_footer_branch
                %264 = sbr.rel target = $region50
              $region55: #{rgcn_forward.7} parent=47 // loop_exit
                _
            $region48: #{rgcn_forward.7} parent=39 // pred_fallthru
              _
          $region40: #{rgcn_forward.7} parent=35 // pred_fallthru
            _
          %300 = vnop
        $region36: #{rgcn_forward.7} parent=27 // pred_fallthru
          _
      $region28: #{rgcn_forward.7} parent=5 // pred_fallthru
        _
      %p301 = scmp.le.s32.totalorder 1, %s14
      %p302 = scmp.lt.s32.totalorder %s14, 4
      %p303 = pnand %p301, %p302
      %p304 = pneg %p303
      // Predicated region
      $region74: #{rgcn_forward.7} parent=5 // pred_check
        _
      $region75: #{rgcn_forward.7} parent=5 // pred_check_branch
        %306 = sbr.rel (%p303) target = $region77
      $region76: #{rgcn_forward.7} parent=5 // pred_region
        %s307 = ssub.s32 %s14, 1
        %s308 = sand.u32 %s93, 1
        %s309 = sand.u32 %s93, 1
        %s310 = smul.addr %s309, 8
        %s311 = scalar_lea.vmem [#allocation2], %s310
        // Predicated region
        $region78: #{rgcn_forward.7} parent=76 // pred_check
          %p312 = pneg %p106
        $region79: #{rgcn_forward.7} parent=76 // pred_check_branch
          %314 = sbr.rel (%p312) target = $region81
        $region80: #{rgcn_forward.7} parent=76 // pred_region
          _
        $region81: #{rgcn_forward.7} parent=76 // pred_fallthru
          _
        %s315 = smul.u32 2, %s23
        %p316 = scmp.lt.s32.totalorder %s24, 2
        %s317 = scalar_select %p316, %s24, 2
        %p318 = scmp.lt.s32.totalorder %s315, 1
        %s319 = scalar_select %p318, %s315, 1
        %s320 = smul.addr %s317, 2
        %s321 = sadd.s32 %s319, %s320
        %s322 = smul.addr %s321, 4
        %s323 = scalar_lea.vmem %s0, %s322
        %p324 = pneg %p54
        %p325 = pneg %p51
        %s326 = smul.u32 2, %s23
        %p327 = scmp.lt.s32.totalorder %s326, 1
        %s328 = scalar_select %p327, %s326, 1
        %s329 = smul.addr %s328, 8
        %s330 = scalar_lea.vmem %s1, %s329
        %p331 = pneg %p80
        %p332 = pneg %p77
        %s333 = sand.u32 %s93, 1
        %s334 = sand.u32 %s93, 1
        %s335 = smul.addr %s334, 8
        %s336 = scalar_lea.vmem [#allocation2], %s335
        %p337 = pneg %p106
        %p338 = pneg %p103
        %p339 = pneg %p127
        %p340 = pneg %p124
        %p341 = pneg %p148
        %p342 = pneg %p145
        %p343 = pneg %p174
        %p344 = pneg %p171
        %p345 = pneg %p200
        %p346 = pneg %p197
        %s347 = smul.u32 2, %s23
        %p348 = scmp.lt.s32.totalorder %s347, 1
        %s349 = scalar_select %p348, %s347, 1
        %s350 = smul.addr %s349, 8
        %s351 = scalar_lea.vmem %s6, %s350
        %s352 = smul.u32 2, %s23
        %p353 = scmp.lt.s32.totalorder %s24, 2
        %s354 = scalar_select %p353, %s24, 2
        %p355 = scmp.lt.s32.totalorder %s352, 1
        %s356 = scalar_select %p355, %s352, 1
        %s357 = smul.addr %s354, 2
        %s358 = sadd.s32 %s356, %s357
        %s359 = smul.addr %s358, 4
        %s360 = scalar_lea.vmem %s0, %s359
        %s361 = smul.u32 2, %s23
        %s362 = smul.u32 2, %s23
        %p363 = scmp.lt.s32.totalorder %s362, 1
        %s364 = scalar_select %p363, %s362, 1
        %s365 = smul.addr %s364, 8
        %s366 = scalar_lea.vmem %s1, %s365
        %s367 = smul.u32 2, %s23
        %s368 = smul.u32 2, %s23
        %s369 = smul.u32 2, %s23
        %p370 = scmp.lt.s32.totalorder %s369, 1
        %s371 = scalar_select %p370, %s369, 1
        %s372 = smul.addr %s371, 8
        %s373 = scalar_lea.vmem %s6, %s372
        %s374 = smul.u32 2, %s23
        %p376 = scmp.eq.s32.totalorder %s24, 0
        // Predicated region
        $region82: #{rgcn_forward.7} parent=76 // pred_check
          %p377 = pneg %p376
        $region83: #{rgcn_forward.7} parent=76 // pred_check_branch
          %379 = sbr.rel (%p377) target = $region85
        $region84: #{rgcn_forward.7} parent=76 // pred_region
          %v380 = vld [vmem:[%s366] sm:$0xff]
          %v381 = vld [vmem:[%s366 + $0x8] sm:$0xff]
          %382 = vst [vmem:[#allocation3] sm:$0xff] %v380
          %383 = vst [vmem:[#allocation3 + $0x8] sm:$0xff] %v381
        $region85: #{rgcn_forward.7} parent=76 // pred_fallthru
          _
        %v384 = vld [vmem:[#allocation3] sm:$0xff]
        %v385 = vld [vmem:[#allocation3 + $0x8] sm:$0xff]
        %v386 = vld [vmem:[%s360] sm:$0xf]
        %v387 = vld [vmem:[%s360 + $0x4] sm:$0xf]
        %v388 = vld [vmem:[%s311] sm:$0xf]
        %v389 = vld [vmem:[%s311 + $0x4] sm:$0xf]
        %v392 = vunpack.c.l.b16 %v386
        %v393 = vunpack.c.l.b16 %v387
        %v394 = vpack.c.b16 %v393, %v392
        %v397 = vunpack.c.l.b16 %v388
        %v398 = vunpack.c.l.b16 %v389
        %v399 = vpack.c.b16 %v398, %v397
        %vm401 = vcmask 130048
        %v403 = vsel %vm401, %v394, 0
        %405 = vmatpush.bf16.msra.mxu0 0
        %406 = vmatpush.bf16.msra.mxu0 0
        %407 = vmatpush.bf16.msra.mxu0 0
        %408 = vmatpush.bf16.msra.mxu0 0
        %409 = vmatpush.bf16.msra.mxu0 0
        %410 = vmatpush.bf16.msra.mxu0 0
        %411 = vmatpush.bf16.msra.mxu0 0
        %412 = vmatpush.bf16.msra.mxu0 %v399
        %413 = vmatmul.bf16.gmra.mxu0 %v403
        %v414 = vpop.f32.mrf.mxu0
        %v415 = vadd.f32 0.0, %v414
        %v416 = vpop.f32.mrf.mxu0
        %v417 = vadd.f32 0.0, %v416
        %418 = vdwg.mxu0
        %v419 = vadd.f32 %v384, %v415
        %v420 = vadd.f32 %v385, %v417
        %421 = vst [vmem:[#allocation3] sm:$0xff] %v419
        %422 = vst [vmem:[#allocation3 + $0x8] sm:$0xff] %v420
        %p423 = scmp.eq.s32.totalorder %s24, 2
        // Predicated region
        $region86: #{rgcn_forward.7} parent=76 // pred_check
          %p424 = pneg %p423
        $region87: #{rgcn_forward.7} parent=76 // pred_check_branch
          %426 = sbr.rel (%p424) target = $region89
        $region88: #{rgcn_forward.7} parent=76 // pred_region
          %v427 = vld [vmem:[#allocation3] sm:$0xff]
          %v428 = vld [vmem:[#allocation3 + $0x8] sm:$0xff]
          %v429 = vld [vmem:[%s3] sm:$0xff]
          %v430 = vld [vmem:[%s3 + $0x8] sm:$0xff]
          %v431 = vld [vmem:[%s3 + $0x10] sm:$0xff]
          %v432 = vld [vmem:[%s3 + $0x18] sm:$0xff]
          %v433 = vld [vmem:[%s3 + $0x20] sm:$0xff]
          %v434 = vld [vmem:[%s3 + $0x28] sm:$0xff]
          %v435 = vld [vmem:[%s3 + $0x30] sm:$0xff]
          %v436 = vld [vmem:[%s3 + $0x38] sm:$0xff]
          %v437 = vld [vmem:[%s3 + $0x40] sm:$0xff]
          %v438 = vld [vmem:[%s3 + $0x48] sm:$0xff]
          %v439 = vld [vmem:[%s3 + $0x50] sm:$0xff]
          %v440 = vld [vmem:[%s3 + $0x58] sm:$0xff]
          %v441 = vld [vmem:[%s3 + $0x60] sm:$0xff]
          %v442 = vld [vmem:[%s3 + $0x68] sm:$0xff]
          %v443 = vld [vmem:[%s3 + $0x70] sm:$0xff]
          %v444 = vld [vmem:[%s3 + $0x78] sm:$0xff]
          %v445 = vld [vmem:[%s4] sm:$0x1]
          %v447 = vperm.slane %v445, 0
          %449 = vmatpush.msra.mxu0 %v444
          %450 = vmatpush.msra.mxu0 %v443
          %451 = vmatpush.msra.mxu0 %v442
          %452 = vmatpush.msra.mxu0 %v441
          %453 = vmatpush.msra.mxu0 %v440
          %454 = vmatpush.msra.mxu0 %v439
          %455 = vmatpush.msra.mxu0 %v438
          %456 = vmatpush.msra.mxu0 %v437
          %457 = vmatpush.msra.mxu0 %v436
          %458 = vmatpush.msra.mxu0 %v435
          %459 = vmatpush.msra.mxu0 %v434
          %460 = vmatpush.msra.mxu0 %v433
          %461 = vmatpush.msra.mxu0 %v432
          %462 = vmatpush.msra.mxu0 %v431
          %463 = vmatpush.msra.mxu0 %v430
          %464 = vmatpush.msra.mxu0 %v429
          %465 = vmatmul.f32.gmra.mxu0 %v427
          %v466 = vpop.f32.mrf.mxu0
          %v467 = vadd.f32 %v447, %v466
          %468 = vmatmul.f32.gmra.mxu0 %v428
          %v469 = vpop.f32.mrf.mxu0
          %v470 = vadd.f32 %v447, %v469
          %471 = vdwg.mxu0
          %472 = vst [vmem:[%s373] sm:$0xff] %v467
          %473 = vst [vmem:[%s373 + $0x8] sm:$0xff] %v470
        $region89: #{rgcn_forward.7} parent=76 // pred_fallthru
          _
        %s474 = smul.u32 2, %s23
        %p475 = scmp.lt.s32.totalorder %s474, 1
        %s476 = scalar_select %p475, %s474, 1
        %s477 = smul.addr %s476, 8
        %s478 = scalar_lea.vmem %s6, %s477
        // Predicated region
        $region90: #{rgcn_forward.7} parent=76 // pred_check
          %p479 = pneg %p171
        $region91: #{rgcn_forward.7} parent=76 // pred_check_branch
          %481 = sbr.rel (%p479) target = $region93
        $region92: #{rgcn_forward.7} parent=76 // pred_region
          %s482 = smul.u32 2, %s23
          %484 = vsyncadd [#allocation4], 0
          %s485 = smul.addr %s482, 8
          %s486 = scalar_lea.hbm %s5, %s485
          %s487 = sshll.u32 [#allocation3], 4
          %s488 = int_to_ptr.vmem [resolvable:$true] %s487
          %s489 = sshll.u32 %s486, 4
          %s490 = int_to_ptr.hbm [resolvable:$true] %s489
          %495 = dma.vmem_to_hbm [thread:$0]  %s488, 256, %s490, [#allocation4], 128, 128, 8
        $region93: #{rgcn_forward.7} parent=76 // pred_fallthru
          _
        // Predicated region
        $region94: #{rgcn_forward.7} parent=76 // pred_check
          %p496 = pneg %p197
        $region95: #{rgcn_forward.7} parent=76 // pred_check_branch
          %498 = sbr.rel (%p496) target = $region97
        $region96: #{rgcn_forward.7} parent=76 // pred_region
          %s499 = smul.u32 2, %s23
        $region97: #{rgcn_forward.7} parent=76 // pred_fallthru
          _
        // Predicated region
        $region98: #{rgcn_forward.7} parent=76 // pred_check
          %p500 = pneg %p171
        $region99: #{rgcn_forward.7} parent=76 // pred_check_branch
          %502 = sbr.rel (%p500) target = $region101
        $region100: #{rgcn_forward.7} parent=76 // pred_region
          %504 = dma.done [#allocation4], 256
        $region101: #{rgcn_forward.7} parent=76 // pred_fallthru
          _
        // Predicated region
        $region102: #{rgcn_forward.7} parent=76 // pred_check
          %p505 = pneg %p197
        $region103: #{rgcn_forward.7} parent=76 // pred_check_branch
          %507 = sbr.rel (%p505) target = $region105
        $region104: #{rgcn_forward.7} parent=76 // pred_region
          %s508 = smul.u32 2, %s23
          %p509 = scmp.lt.s32.totalorder %s508, 1
          %s510 = scalar_select %p509, %s508, 1
          %s511 = smul.addr %s510, 8
          %s512 = scalar_lea.vmem %s6, %s511
        $region105: #{rgcn_forward.7} parent=76 // pred_fallthru
          _
      $region77: #{rgcn_forward.7} parent=5 // pred_fallthru
        _
      %p513 = scmp.le.s32.totalorder 2, %s14
      // Predicated region
      $region106: #{rgcn_forward.7} parent=5 // pred_check
        %p514 = pneg %p513
      $region107: #{rgcn_forward.7} parent=5 // pred_check_branch
        %516 = sbr.rel (%p514) target = $region109
      $region108: #{rgcn_forward.7} parent=5 // pred_region
        %s517 = ssub.s32 %s14, 2
      $region109: #{rgcn_forward.7} parent=5 // pred_fallthru
        _
    $region6: #{rgcn_forward.7} parent=1 // loop_footer
      %s18 = sadd.s32 1, %s14
    $region7: #{rgcn_forward.7} parent=1 // loop_footer_branch
      %13 = sbr.rel target = $region3
    $region8: #{rgcn_forward.7} parent=1 // loop_exit
      _
    %518 = vsyncpa [#allocation4], 1
    %s519 = scalar_lea.sflag [#allocation4], 1
    %520 = vsyncpa %s519, 1

</llo_original>
